<compile_context>
chip_gen: v6e
topology: v6e:2x2x1
jax: 0.10.0
libtpu: 0.0.40
codegen_flags: <defaults>
</compile_context>

<pallas_src>
import functools

import numpy as np
import jax
import jax.numpy as jnp
from jax.experimental import pallas as pl
from jax.experimental.pallas import tpu as pltpu

EPS = 1e-5                       # nn.BatchNorm2d default eps
_SQRT_2_OVER_PI = 0.7978845608028654
_GELU_C = 0.044715

_LANE = 128
_KEEP_CONV_VMEM_BUDGET = 24 * (1 << 20)   # conservative for v7x (64 MiB VMEM)


def _round_up(x, m):
    return ((x + m - 1) // m) * m


def _gelu_tanh(y):
    # tanh-form GELU (1 EUP tanh); max abs error vs exact erf GELU ~3e-4.
    return 0.5 * y * (1.0 + jnp.tanh(_SQRT_2_OVER_PI * (y + _GELU_C * y * y * y)))


# ---------------------------------------------------------------------------
# Fused kernel: grid = (phase, n).  Phase 0: conv (+ stat partials) for the
# whole sample n.  Phase 1: fold stats once, apply BN + GELU, write output.
# ---------------------------------------------------------------------------
def _fused_kernel(x_ref, w_ref, mask_ref, gamma_ref, bvec_ref, out_ref,
                  ssum_ref, ssq_ref, scale_ref, shift_ref, conv_ref=None, *,
                  apply_bn, keep_conv, tap_offsets, tile_s, num_chunks,
                  inv_count):
    phase = pl.program_id(0)
    n = pl.program_id(1)
    cout = out_ref.shape[0]

    def conv_chunk(j):
        # (Cout, Cin) @ (Cin, tile) accumulated over the K*K statically
        # shifted lane-dense views of the flattened padded input.
        c0 = j * tile_s
        acc = jnp.zeros((cout, tile_s), jnp.float32)
        for t, off in enumerate(tap_offsets):
            xt = x_ref[:, off + c0: off + c0 + tile_s]          # (Cin, tile) bf16
            acc = acc + jnp.dot(w_ref[t], xt,
                                preferred_element_type=jnp.float32)
        return acc

    # ------ phase 0: conv into VMEM scratch + lane-parallel stat partials --
    if apply_bn or keep_conv:
        @pl.when(phase == 0)
        def _phase0():
            s_part = jnp.zeros((cout, _LANE), jnp.float32)
            q_part = jnp.zeros((cout, _LANE), jnp.float32)
            for j in range(num_chunks):
                acc = conv_chunk(j)
                if keep_conv:
                    conv_ref[n * num_chunks + j] = acc
                if apply_bn:
                    c0 = j * tile_s
                    masked = acc * mask_ref[:, c0:c0 + tile_s]   # drop wrap/pad cols
                    sq = acc * masked                            # conv^2 * mask
                    for g in range(tile_s // _LANE):             # VALU adds only
                        s_part = s_part + masked[:, g * _LANE:(g + 1) * _LANE]
                        q_part = q_part + sq[:, g * _LANE:(g + 1) * _LANE]
            if apply_bn:
                @pl.when(n == 0)
                def _init():
                    ssum_ref[...] = s_part
                    ssq_ref[...] = q_part

                @pl.when(n > 0)
                def _accum():
                    ssum_ref[...] = ssum_ref[...] + s_part
                    ssq_ref[...] = ssq_ref[...] + q_part

    # ------ phase 1: finalize scale/shift once, apply BN + GELU ------------
    @pl.when(phase == 1)
    def _phase1():
        @pl.when(n == 0)
        def _finalize():
            if apply_bn:
                tot = jnp.sum(ssum_ref[...], axis=1, keepdims=True)   # one XLU reduce
                tsq = jnp.sum(ssq_ref[...], axis=1, keepdims=True)
                mean = tot * inv_count
                var = jnp.maximum(tsq * inv_count - mean * mean, 0.0)
                sc = gamma_ref[...] * jax.lax.rsqrt(var + EPS)
                scale_ref[...] = sc
                shift_ref[...] = bvec_ref[...] - mean * sc
            else:
                # Module skips BN for 1x1 spatial output: conv + bias only.
                scale_ref[...] = jnp.ones(scale_ref.shape, jnp.float32)
                shift_ref[...] = bvec_ref[...]

        sc = scale_ref[...]
        sh = shift_ref[...]
        for j in range(num_chunks):
            c0 = j * tile_s
            acc = conv_ref[n * num_chunks + j] if keep_conv else conv_chunk(j)
            out_ref[:, c0:c0 + tile_s] = _gelu_tanh(acc * sc + sh)


@functools.partial(jax.jit, static_argnames=("stride", "padding"))
def conv_with_norms(x, w, b, gamma, beta, *, stride, padding):
    """x: (N, Cin, H, W) f32; w: (Cout, Cin, K, K); b/gamma/beta: (Cout,)."""
    N, Cin, H, W = x.shape
    Cout, _, K, _ = w.shape
    OH = (H + 2 * padding - K) // stride + 1
    OW = (W + 2 * padding - K) // stride + 1
    apply_bn = not (OH == 1 and OW == 1)       # static, mirrors the module's `if`

    Hp, Wp = H + 2 * padding, W + 2 * padding
    xpad = jnp.pad(x.astype(jnp.float32),
                   ((0, 0), (0, 0), (padding, padding), (padding, padding)))

    if stride == 1:
        # "Widened" conv: compute output over (OH, Wp) columns so every tap is
        # a contiguous shift of the flat padded input -> no im2col stream.
        s_wide = OH * Wp
        s_pad = _round_up(s_wide, _LANE)
        tap_offsets = tuple(kh * Wp + kw for kh in range(K) for kw in range(K))
        L = _round_up(s_pad + (K - 1) * (Wp + 1), _LANE)
        xsrc = jnp.pad(xpad.reshape(N, Cin, Hp * Wp),
                       ((0, 0), (0, 0), (0, L - Hp * Wp)))
        idx = np.arange(s_pad)
        valid = (idx < s_wide) & ((idx % Wp) < OW)
    else:
        # TODO(synk): stride>1 falls back to a host-side K*K shifted-view
        # gather (im2col-sized stream); move the strided patch gather in-kernel
        # to remove it.  Untested config in this script's main.
        S = OH * OW
        s_pad = _round_up(S, _LANE)
        views = []
        for kh in range(K):
            for kw in range(K):
                v = xpad[:, :, kh:kh + stride * OH:stride,
                               kw:kw + stride * OW:stride].reshape(N, Cin, S)
                views.append(jnp.pad(v, ((0, 0), (0, 0), (0, s_pad - S))))
        xsrc = jnp.concatenate(views, axis=2)
        L = xsrc.shape[2]
        tap_offsets = tuple(t * s_pad for t in range(K * K))
        s_wide = S
        valid = np.arange(s_pad) < S

    # bf16 streaming of the heavy operands (stats / epilogue stay f32).
    xsrc = xsrc.astype(jnp.bfloat16)
    w_taps = jnp.transpose(w.astype(jnp.float32), (2, 3, 0, 1)) \
                .reshape(K * K, Cout, Cin).astype(jnp.bfloat16)
    mask = jnp.asarray(valid.astype(np.float32)).reshape(1, s_pad)
    gamma2 = gamma.astype(jnp.float32).reshape(Cout, 1)
    bvec = (beta if apply_bn else b).astype(jnp.float32).reshape(Cout, 1)

    tile_s = next(t for t in (512, 256, 128) if s_pad % t == 0)
    num_chunks = s_pad // tile_s
    KK = K * K

    # VMEM budget: keep the f32 conv intermediate resident when it fits
    # comfortably (v7x has 64 MiB VMEM / 32 MiB default scoped); otherwise
    # recompute it in phase 1 (costs one extra bf16 read of x, never HBM f32).
    base_bytes = (2 * Cin * L * 2 + 2 * KK * Cout * Cin * 2 + 2 * s_pad * 4
                  + 4 * Cout * 4 + 2 * Cout * s_pad * 4
                  + 2 * Cout * _LANE * 4 + 2 * Cout * 4)
    conv_bytes = N * Cout * s_pad * 4
    keep_conv = (base_bytes + conv_bytes) <= _KEEP_CONV_VMEM_BUDGET
    vmem_limit = int(min(64 << 20,
                         max(32 << 20,
                             2 * (base_bytes + (conv_bytes if keep_conv else 0)))))
    # TODO(synk): very large per-sample spatial extents would additionally need
    # row tiling of xsrc (halo DMA); not required at these shapes.

    kernel = functools.partial(
        _fused_kernel, apply_bn=apply_bn, keep_conv=keep_conv,
        tap_offsets=tap_offsets, tile_s=tile_s, num_chunks=num_chunks,
        inv_count=1.0 / float(N * OH * OW))

    scratch_shapes = [
        pltpu.VMEM((Cout, _LANE), jnp.float32),   # per-channel sum partials
        pltpu.VMEM((Cout, _LANE), jnp.float32),   # per-channel sumsq partials
        pltpu.VMEM((Cout, 1), jnp.float32),       # folded scale
        pltpu.VMEM((Cout, 1), jnp.float32),       # folded shift
    ]
    if keep_conv:
        scratch_shapes.append(
            pltpu.VMEM((N * num_chunks, Cout, tile_s), jnp.float32))

    if keep_conv:
        # Phase 1 never touches x: freeze its block on the last-fetched sample
        # so no redundant DMA is issued.
        x_map = lambda p, n, _N=N: (n * (1 - p) + (_N - 1) * p, 0, 0)
    else:
        x_map = lambda p, n: (n, 0, 0)            # phase 1 recomputes the conv

    out = pl.pallas_call(
        kernel,
        out_shape=jax.ShapeDtypeStruct((N, Cout, s_pad), jnp.float32),
        grid=(2, N),                              # phase-major, one sample/step
        in_specs=[
            pl.BlockSpec((None, Cin, L), x_map),
            # Constant-index small operands: fetched once, never re-DMA'd.
            # TODO(synk): pipeline_mode=pl.Buffered(1) to drop the redundant
            # second weight buffer once Cout*Cin*K*K is large enough to matter.
            pl.BlockSpec((KK, Cout, Cin), lambda p, n: (0, 0, 0)),
            pl.BlockSpec((1, s_pad), lambda p, n: (0, 0)),
            pl.BlockSpec((Cout, 1), lambda p, n: (0, 0)),
            pl.BlockSpec((Cout, 1), lambda p, n: (0, 0)),
        ],
        # Frozen on block 0 during phase 0 (nothing is written there), so no
        # garbage writeback happens; phase 1 writes each sample block once.
        out_specs=pl.BlockSpec((None, Cout, s_pad), lambda p, n: (n * p, 0, 0)),
        scratch_shapes=scratch_shapes,
        compiler_params=pltpu.CompilerParams(
            # Phase must be sequential; N carries the resident batch-stat
            # accumulators -> both "arbitrary" (see header trade-off note).
            dimension_semantics=("arbitrary", "arbitrary"),
            vmem_limit_bytes=vmem_limit),
    )(xsrc, w_taps, mask, gamma2, bvec)

    # Drop the lane padding and (stride==1) the widened wrap columns.
    out = out[:, :, :s_wide]
    if stride == 1:
        out = out.reshape(N, Cout, OH, Wp)[:, :, :, :OW]
    else:
        out = out.reshape(N, Cout, OH, OW)
    return out


def _reference(x, w, b, gamma, beta, *, stride, padding):
    conv = jax.lax.conv_general_dilated(
        x, w, (stride, stride), [(padding, padding)] * 2,
        dimension_numbers=("NCHW", "OIHW", "NCHW"),
        precision=jax.lax.Precision.HIGHEST,
    ) + b.reshape(1, -1, 1, 1)
    if conv.shape[2] == 1 and conv.shape[3] == 1:
        y = conv
    else:
        mean = conv.mean(axis=(0, 2, 3), keepdims=True)
        var = ((conv - mean) ** 2).mean(axis=(0, 2, 3), keepdims=True)
        y = gamma.reshape(1, -1, 1, 1) * (conv - mean) * jax.lax.rsqrt(var + EPS) \
            + beta.reshape(1, -1, 1, 1)
    return 0.5 * y * (1.0 + jax.scipy.special.erf(y / np.sqrt(2.0)))


if __name__ == "__main__":
    # ConvWithNorms(in_num_channels=4, out_num_channels=8, kernel_size=3,
    #               stride=1, padding=1)
    N, Cin, H, W = 2, 4, 16, 16
    Cout, K, stride, padding = 8, 3, 1, 1

    key = jax.random.PRNGKey(0)
    kx, kw, kb, kg, kbe = jax.random.split(key, 5)
    x = jax.random.normal(kx, (N, Cin, H, W), dtype=jnp.float32)
    w = 0.1 * jax.random.normal(kw, (Cout, Cin, K, K), dtype=jnp.float32)
    b = 0.1 * jax.random.normal(kb, (Cout,), dtype=jnp.float32)
    gamma = 1.0 + 0.1 * jax.random.normal(kg, (Cout,), dtype=jnp.float32)
    beta = 0.1 * jax.random.normal(kbe, (Cout,), dtype=jnp.float32)

    out = conv_with_norms(x, w, b, gamma, beta, stride=stride, padding=padding)
    out = jax.block_until_ready(out)

    ref = _reference(x, w, b, gamma, beta, stride=stride, padding=padding)
    assert out.shape == (N, Cout, H, W)
    assert np.allclose(np.asarray(out), np.asarray(ref), rtol=2e-2, atol=2e-2)

    print("KERNEL_OK")
</pallas_src>

<mosaic_0001>
module attributes {stable_mosaic.version = 11 : i64} {
  func.func @_fused_kernel(%arg0: i32, %arg1: i32, %arg2: memref<1x4x512xbf16, #tpu.memory_space<vmem>>, %arg3: memref<9x8x4xbf16, #tpu.memory_space<vmem>>, %arg4: memref<1x384xf32, #tpu.memory_space<vmem>>, %arg5: memref<8x1xf32, #tpu.memory_space<vmem>>, %arg6: memref<8x1xf32, #tpu.memory_space<vmem>>, %arg7: memref<1x8x384xf32, #tpu.memory_space<vmem>>, %arg8: memref<8x128xf32, #tpu.memory_space<vmem>>, %arg9: memref<8x128xf32, #tpu.memory_space<vmem>>, %arg10: memref<8x1xf32, #tpu.memory_space<vmem>>, %arg11: memref<8x1xf32, #tpu.memory_space<vmem>>, %arg12: memref<6x8x128xf32, #tpu.memory_space<vmem>>) attributes {dimension_semantics = [#tpu.dimension_semantics<arbitrary>, #tpu.dimension_semantics<arbitrary>], iteration_bounds = array<i64: 2, 2>, scalar_prefetch = 0 : i64, scratch_operands = 5 : i64, tpu.core_type = #tpu.core_type<tc>, window_params = [{transform_indices = @transform_0, window_bounds = array<i64: 1, 4, 512>}, {pipeline_mode = #tpu.pipeline_mode<synchronous>, transform_indices = @transform_1, window_bounds = array<i64: 9, 8, 4>}, {pipeline_mode = #tpu.pipeline_mode<synchronous>, transform_indices = @transform_2, window_bounds = array<i64: 1, 384>}, {pipeline_mode = #tpu.pipeline_mode<synchronous>, transform_indices = @transform_3, window_bounds = array<i64: 8, 1>}, {pipeline_mode = #tpu.pipeline_mode<synchronous>, transform_indices = @transform_4, window_bounds = array<i64: 8, 1>}, {transform_indices = @transform_5, window_bounds = array<i64: 1, 8, 384>}]} {
    %c0_i32 = arith.constant 0 : i32
    %0 = arith.cmpi eq, %arg0, %c0_i32 : i32
    %1 = arith.extui %0 : i1 to i32
    %c0_i32_0 = arith.constant 0 : i32
    %2 = arith.cmpi ne, %1, %c0_i32_0 : i32
    scf.if %2 {
      %cst = arith.constant 0.000000e+00 : f32
      %6 = vector.broadcast %cst : f32 to vector<8x128xf32>
      %cst_2 = arith.constant 0.000000e+00 : f32
      %7 = vector.broadcast %cst_2 : f32 to vector<8x128xf32>
      %cst_3 = arith.constant 0.000000e+00 : f32
      %8 = vector.broadcast %cst_3 : f32 to vector<8x128xf32>
      %c0 = arith.constant 0 : index
      %c0_4 = arith.constant 0 : index
      %c0_5 = arith.constant 0 : index
      %9 = vector.load %arg2[%c0, %c0_4, %c0_5] : memref<1x4x512xbf16, #tpu.memory_space<vmem>>, vector<1x4x128xbf16>
      %10 = vector.shape_cast %9 : vector<1x4x128xbf16> to vector<4x128xbf16>
      %c0_6 = arith.constant 0 : index
      %c0_7 = arith.constant 0 : index
      %c0_8 = arith.constant 0 : index
      %11 = vector.load %arg3[%c0_6, %c0_7, %c0_8] : memref<9x8x4xbf16, #tpu.memory_space<vmem>>, vector<1x8x4xbf16>
      %12 = vector.shape_cast %11 : vector<1x8x4xbf16> to vector<8x4xbf16>
      %cst_9 = arith.constant dense<0.000000e+00> : vector<8x128xf32>
      %13 = tpu.matmul %12, %10, %cst_9 {dimension_numbers = #tpu.dot_dimension_numbers<[1], [0], [0], [1], [0, 0, 1, 1], [], []>} : vector<8x4xbf16>, vector<4x128xbf16>, vector<8x128xf32> -> vector<8x128xf32>
      %14 = arith.addf %8, %13 : vector<8x128xf32>
      %c0_10 = arith.constant 0 : index
      %c0_11 = arith.constant 0 : index
      %c1 = arith.constant 1 : index
      %15 = vector.load %arg2[%c0_10, %c0_11, %c1] : memref<1x4x512xbf16, #tpu.memory_space<vmem>>, vector<1x4x128xbf16>
      %16 = vector.shape_cast %15 : vector<1x4x128xbf16> to vector<4x128xbf16>
      %c1_12 = arith.constant 1 : index
      %c0_13 = arith.constant 0 : index
      %c0_14 = arith.constant 0 : index
      %17 = vector.load %arg3[%c1_12, %c0_13, %c0_14] : memref<9x8x4xbf16, #tpu.memory_space<vmem>>, vector<1x8x4xbf16>
      %18 = vector.shape_cast %17 : vector<1x8x4xbf16> to vector<8x4xbf16>
      %cst_15 = arith.constant dense<0.000000e+00> : vector<8x128xf32>
      %19 = tpu.matmul %18, %16, %cst_15 {dimension_numbers = #tpu.dot_dimension_numbers<[1], [0], [0], [1], [0, 0, 1, 1], [], []>} : vector<8x4xbf16>, vector<4x128xbf16>, vector<8x128xf32> -> vector<8x128xf32>
      %20 = arith.addf %14, %19 : vector<8x128xf32>
      %c0_16 = arith.constant 0 : index
      %c0_17 = arith.constant 0 : index
      %c2 = arith.constant 2 : index
      %21 = vector.load %arg2[%c0_16, %c0_17, %c2] : memref<1x4x512xbf16, #tpu.memory_space<vmem>>, vector<1x4x128xbf16>
      %22 = vector.shape_cast %21 : vector<1x4x128xbf16> to vector<4x128xbf16>
      %c2_18 = arith.constant 2 : index
      %c0_19 = arith.constant 0 : index
      %c0_20 = arith.constant 0 : index
      %23 = vector.load %arg3[%c2_18, %c0_19, %c0_20] : memref<9x8x4xbf16, #tpu.memory_space<vmem>>, vector<1x8x4xbf16>
      %24 = vector.shape_cast %23 : vector<1x8x4xbf16> to vector<8x4xbf16>
      %cst_21 = arith.constant dense<0.000000e+00> : vector<8x128xf32>
      %25 = tpu.matmul %24, %22, %cst_21 {dimension_numbers = #tpu.dot_dimension_numbers<[1], [0], [0], [1], [0, 0, 1, 1], [], []>} : vector<8x4xbf16>, vector<4x128xbf16>, vector<8x128xf32> -> vector<8x128xf32>
      %26 = arith.addf %20, %25 : vector<8x128xf32>
      %c0_22 = arith.constant 0 : index
      %c0_23 = arith.constant 0 : index
      %c18 = arith.constant 18 : index
      %27 = vector.load %arg2[%c0_22, %c0_23, %c18] : memref<1x4x512xbf16, #tpu.memory_space<vmem>>, vector<1x4x128xbf16>
      %28 = vector.shape_cast %27 : vector<1x4x128xbf16> to vector<4x128xbf16>
      %c3 = arith.constant 3 : index
      %c0_24 = arith.constant 0 : index
      %c0_25 = arith.constant 0 : index
      %29 = vector.load %arg3[%c3, %c0_24, %c0_25] : memref<9x8x4xbf16, #tpu.memory_space<vmem>>, vector<1x8x4xbf16>
      %30 = vector.shape_cast %29 : vector<1x8x4xbf16> to vector<8x4xbf16>
      %cst_26 = arith.constant dense<0.000000e+00> : vector<8x128xf32>
      %31 = tpu.matmul %30, %28, %cst_26 {dimension_numbers = #tpu.dot_dimension_numbers<[1], [0], [0], [1], [0, 0, 1, 1], [], []>} : vector<8x4xbf16>, vector<4x128xbf16>, vector<8x128xf32> -> vector<8x128xf32>
      %32 = arith.addf %26, %31 : vector<8x128xf32>
      %c0_27 = arith.constant 0 : index
      %c0_28 = arith.constant 0 : index
      %c19 = arith.constant 19 : index
      %33 = vector.load %arg2[%c0_27, %c0_28, %c19] : memref<1x4x512xbf16, #tpu.memory_space<vmem>>, vector<1x4x128xbf16>
      %34 = vector.shape_cast %33 : vector<1x4x128xbf16> to vector<4x128xbf16>
      %c4 = arith.constant 4 : index
      %c0_29 = arith.constant 0 : index
      %c0_30 = arith.constant 0 : index
      %35 = vector.load %arg3[%c4, %c0_29, %c0_30] : memref<9x8x4xbf16, #tpu.memory_space<vmem>>, vector<1x8x4xbf16>
      %36 = vector.shape_cast %35 : vector<1x8x4xbf16> to vector<8x4xbf16>
      %cst_31 = arith.constant dense<0.000000e+00> : vector<8x128xf32>
      %37 = tpu.matmul %36, %34, %cst_31 {dimension_numbers = #tpu.dot_dimension_numbers<[1], [0], [0], [1], [0, 0, 1, 1], [], []>} : vector<8x4xbf16>, vector<4x128xbf16>, vector<8x128xf32> -> vector<8x128xf32>
      %38 = arith.addf %32, %37 : vector<8x128xf32>
      %c0_32 = arith.constant 0 : index
      %c0_33 = arith.constant 0 : index
      %c20 = arith.constant 20 : index
      %39 = vector.load %arg2[%c0_32, %c0_33, %c20] : memref<1x4x512xbf16, #tpu.memory_space<vmem>>, vector<1x4x128xbf16>
      %40 = vector.shape_cast %39 : vector<1x4x128xbf16> to vector<4x128xbf16>
      %c5 = arith.constant 5 : index
      %c0_34 = arith.constant 0 : index
      %c0_35 = arith.constant 0 : index
      %41 = vector.load %arg3[%c5, %c0_34, %c0_35] : memref<9x8x4xbf16, #tpu.memory_space<vmem>>, vector<1x8x4xbf16>
      %42 = vector.shape_cast %41 : vector<1x8x4xbf16> to vector<8x4xbf16>
      %cst_36 = arith.constant dense<0.000000e+00> : vector<8x128xf32>
      %43 = tpu.matmul %42, %40, %cst_36 {dimension_numbers = #tpu.dot_dimension_numbers<[1], [0], [0], [1], [0, 0, 1, 1], [], []>} : vector<8x4xbf16>, vector<4x128xbf16>, vector<8x128xf32> -> vector<8x128xf32>
      %44 = arith.addf %38, %43 : vector<8x128xf32>
      %c0_37 = arith.constant 0 : index
      %c0_38 = arith.constant 0 : index
      %c36 = arith.constant 36 : index
      %45 = vector.load %arg2[%c0_37, %c0_38, %c36] : memref<1x4x512xbf16, #tpu.memory_space<vmem>>, vector<1x4x128xbf16>
      %46 = vector.shape_cast %45 : vector<1x4x128xbf16> to vector<4x128xbf16>
      %c6 = arith.constant 6 : index
      %c0_39 = arith.constant 0 : index
      %c0_40 = arith.constant 0 : index
      %47 = vector.load %arg3[%c6, %c0_39, %c0_40] : memref<9x8x4xbf16, #tpu.memory_space<vmem>>, vector<1x8x4xbf16>
      %48 = vector.shape_cast %47 : vector<1x8x4xbf16> to vector<8x4xbf16>
      %cst_41 = arith.constant dense<0.000000e+00> : vector<8x128xf32>
      %49 = tpu.matmul %48, %46, %cst_41 {dimension_numbers = #tpu.dot_dimension_numbers<[1], [0], [0], [1], [0, 0, 1, 1], [], []>} : vector<8x4xbf16>, vector<4x128xbf16>, vector<8x128xf32> -> vector<8x128xf32>
      %50 = arith.addf %44, %49 : vector<8x128xf32>
      %c0_42 = arith.constant 0 : index
      %c0_43 = arith.constant 0 : index
      %c37 = arith.constant 37 : index
      %51 = vector.load %arg2[%c0_42, %c0_43, %c37] : memref<1x4x512xbf16, #tpu.memory_space<vmem>>, vector<1x4x128xbf16>
      %52 = vector.shape_cast %51 : vector<1x4x128xbf16> to vector<4x128xbf16>
      %c7 = arith.constant 7 : index
      %c0_44 = arith.constant 0 : index
      %c0_45 = arith.constant 0 : index
      %53 = vector.load %arg3[%c7, %c0_44, %c0_45] : memref<9x8x4xbf16, #tpu.memory_space<vmem>>, vector<1x8x4xbf16>
      %54 = vector.shape_cast %53 : vector<1x8x4xbf16> to vector<8x4xbf16>
      %cst_46 = arith.constant dense<0.000000e+00> : vector<8x128xf32>
      %55 = tpu.matmul %54, %52, %cst_46 {dimension_numbers = #tpu.dot_dimension_numbers<[1], [0], [0], [1], [0, 0, 1, 1], [], []>} : vector<8x4xbf16>, vector<4x128xbf16>, vector<8x128xf32> -> vector<8x128xf32>
      %56 = arith.addf %50, %55 : vector<8x128xf32>
      %c0_47 = arith.constant 0 : index
      %c0_48 = arith.constant 0 : index
      %c38 = arith.constant 38 : index
      %57 = vector.load %arg2[%c0_47, %c0_48, %c38] : memref<1x4x512xbf16, #tpu.memory_space<vmem>>, vector<1x4x128xbf16>
      %58 = vector.shape_cast %57 : vector<1x4x128xbf16> to vector<4x128xbf16>
      %c8 = arith.constant 8 : index
      %c0_49 = arith.constant 0 : index
      %c0_50 = arith.constant 0 : index
      %59 = vector.load %arg3[%c8, %c0_49, %c0_50] : memref<9x8x4xbf16, #tpu.memory_space<vmem>>, vector<1x8x4xbf16>
      %60 = vector.shape_cast %59 : vector<1x8x4xbf16> to vector<8x4xbf16>
      %cst_51 = arith.constant dense<0.000000e+00> : vector<8x128xf32>
      %61 = tpu.matmul %60, %58, %cst_51 {dimension_numbers = #tpu.dot_dimension_numbers<[1], [0], [0], [1], [0, 0, 1, 1], [], []>} : vector<8x4xbf16>, vector<4x128xbf16>, vector<8x128xf32> -> vector<8x128xf32>
      %62 = arith.addf %56, %61 : vector<8x128xf32>
      %c3_i32 = arith.constant 3 : i32
      %63 = arith.muli %arg1, %c3_i32 : i32
      %c0_i32_52 = arith.constant 0 : i32
      %64 = arith.addi %63, %c0_i32_52 : i32
      %65 = arith.index_cast %64 : i32 to index
      %c0_53 = arith.constant 0 : index
      %c0_54 = arith.constant 0 : index
      %66 = vector.load %arg12[%65, %c0_53, %c0_54] : memref<6x8x128xf32, #tpu.memory_space<vmem>>, vector<1x8x128xf32>
      %67 = vector.shape_cast %66 : vector<1x8x128xf32> to vector<8x128xf32>
      %68 = vector.shape_cast %62 : vector<8x128xf32> to vector<1x8x128xf32>
      tpu.vector_store %arg12[%65, %c0_53, %c0_54], %68 {strides = array<i32>} : memref<6x8x128xf32, #tpu.memory_space<vmem>>, vector<1x8x128xf32>,
      %c0_55 = arith.constant 0 : index
      %c0_56 = arith.constant 0 : index
      %69 = vector.load %arg4[%c0_55, %c0_56] : memref<1x384xf32, #tpu.memory_space<vmem>>, vector<1x128xf32>
      %70 = vector.broadcast %69 : vector<1x128xf32> to vector<8x128xf32>
      %71 = arith.mulf %62, %70 : vector<8x128xf32>
      %72 = arith.mulf %62, %71 : vector<8x128xf32>
      %73 = arith.addf %6, %71 : vector<8x128xf32>
      %74 = arith.addf %7, %72 : vector<8x128xf32>
      %cst_57 = arith.constant 0.000000e+00 : f32
      %75 = vector.broadcast %cst_57 : f32 to vector<8x128xf32>
      %c0_58 = arith.constant 0 : index
      %c0_59 = arith.constant 0 : index
      %c128 = arith.constant 128 : index
      %76 = vector.load %arg2[%c0_58, %c0_59, %c128] : memref<1x4x512xbf16, #tpu.memory_space<vmem>>, vector<1x4x128xbf16>
      %77 = vector.shape_cast %76 : vector<1x4x128xbf16> to vector<4x128xbf16>
      %c0_60 = arith.constant 0 : index
      %c0_61 = arith.constant 0 : index
      %c0_62 = arith.constant 0 : index
      %78 = vector.load %arg3[%c0_60, %c0_61, %c0_62] : memref<9x8x4xbf16, #tpu.memory_space<vmem>>, vector<1x8x4xbf16>
      %79 = vector.shape_cast %78 : vector<1x8x4xbf16> to vector<8x4xbf16>
      %cst_63 = arith.constant dense<0.000000e+00> : vector<8x128xf32>
      %80 = tpu.matmul %79, %77, %cst_63 {dimension_numbers = #tpu.dot_dimension_numbers<[1], [0], [0], [1], [0, 0, 1, 1], [], []>} : vector<8x4xbf16>, vector<4x128xbf16>, vector<8x128xf32> -> vector<8x128xf32>
      %81 = arith.addf %75, %80 : vector<8x128xf32>
      %c0_64 = arith.constant 0 : index
      %c0_65 = arith.constant 0 : index
      %c129 = arith.constant 129 : index
      %82 = vector.load %arg2[%c0_64, %c0_65, %c129] : memref<1x4x512xbf16, #tpu.memory_space<vmem>>, vector<1x4x128xbf16>
      %83 = vector.shape_cast %82 : vector<1x4x128xbf16> to vector<4x128xbf16>
      %c1_66 = arith.constant 1 : index
      %c0_67 = arith.constant 0 : index
      %c0_68 = arith.constant 0 : index
      %84 = vector.load %arg3[%c1_66, %c0_67, %c0_68] : memref<9x8x4xbf16, #tpu.memory_space<vmem>>, vector<1x8x4xbf16>
      %85 = vector.shape_cast %84 : vector<1x8x4xbf16> to vector<8x4xbf16>
      %cst_69 = arith.constant dense<0.000000e+00> : vector<8x128xf32>
      %86 = tpu.matmul %85, %83, %cst_69 {dimension_numbers = #tpu.dot_dimension_numbers<[1], [0], [0], [1], [0, 0, 1, 1], [], []>} : vector<8x4xbf16>, vector<4x128xbf16>, vector<8x128xf32> -> vector<8x128xf32>
      %87 = arith.addf %81, %86 : vector<8x128xf32>
      %c0_70 = arith.constant 0 : index
      %c0_71 = arith.constant 0 : index
      %c130 = arith.constant 130 : index
      %88 = vector.load %arg2[%c0_70, %c0_71, %c130] : memref<1x4x512xbf16, #tpu.memory_space<vmem>>, vector<1x4x128xbf16>
      %89 = vector.shape_cast %88 : vector<1x4x128xbf16> to vector<4x128xbf16>
      %c2_72 = arith.constant 2 : index
      %c0_73 = arith.constant 0 : index
      %c0_74 = arith.constant 0 : index
      %90 = vector.load %arg3[%c2_72, %c0_73, %c0_74] : memref<9x8x4xbf16, #tpu.memory_space<vmem>>, vector<1x8x4xbf16>
      %91 = vector.shape_cast %90 : vector<1x8x4xbf16> to vector<8x4xbf16>
      %cst_75 = arith.constant dense<0.000000e+00> : vector<8x128xf32>
      %92 = tpu.matmul %91, %89, %cst_75 {dimension_numbers = #tpu.dot_dimension_numbers<[1], [0], [0], [1], [0, 0, 1, 1], [], []>} : vector<8x4xbf16>, vector<4x128xbf16>, vector<8x128xf32> -> vector<8x128xf32>
      %93 = arith.addf %87, %92 : vector<8x128xf32>
      %c0_76 = arith.constant 0 : index
      %c0_77 = arith.constant 0 : index
      %c146 = arith.constant 146 : index
      %94 = vector.load %arg2[%c0_76, %c0_77, %c146] : memref<1x4x512xbf16, #tpu.memory_space<vmem>>, vector<1x4x128xbf16>
      %95 = vector.shape_cast %94 : vector<1x4x128xbf16> to vector<4x128xbf16>
      %c3_78 = arith.constant 3 : index
      %c0_79 = arith.constant 0 : index
      %c0_80 = arith.constant 0 : index
      %96 = vector.load %arg3[%c3_78, %c0_79, %c0_80] : memref<9x8x4xbf16, #tpu.memory_space<vmem>>, vector<1x8x4xbf16>
      %97 = vector.shape_cast %96 : vector<1x8x4xbf16> to vector<8x4xbf16>
      %cst_81 = arith.constant dense<0.000000e+00> : vector<8x128xf32>
      %98 = tpu.matmul %97, %95, %cst_81 {dimension_numbers = #tpu.dot_dimension_numbers<[1], [0], [0], [1], [0, 0, 1, 1], [], []>} : vector<8x4xbf16>, vector<4x128xbf16>, vector<8x128xf32> -> vector<8x128xf32>
      %99 = arith.addf %93, %98 : vector<8x128xf32>
      %c0_82 = arith.constant 0 : index
      %c0_83 = arith.constant 0 : index
      %c147 = arith.constant 147 : index
      %100 = vector.load %arg2[%c0_82, %c0_83, %c147] : memref<1x4x512xbf16, #tpu.memory_space<vmem>>, vector<1x4x128xbf16>
      %101 = vector.shape_cast %100 : vector<1x4x128xbf16> to vector<4x128xbf16>
      %c4_84 = arith.constant 4 : index
      %c0_85 = arith.constant 0 : index
      %c0_86 = arith.constant 0 : index
      %102 = vector.load %arg3[%c4_84, %c0_85, %c0_86] : memref<9x8x4xbf16, #tpu.memory_space<vmem>>, vector<1x8x4xbf16>
      %103 = vector.shape_cast %102 : vector<1x8x4xbf16> to vector<8x4xbf16>
      %cst_87 = arith.constant dense<0.000000e+00> : vector<8x128xf32>
      %104 = tpu.matmul %103, %101, %cst_87 {dimension_numbers = #tpu.dot_dimension_numbers<[1], [0], [0], [1], [0, 0, 1, 1], [], []>} : vector<8x4xbf16>, vector<4x128xbf16>, vector<8x128xf32> -> vector<8x128xf32>
      %105 = arith.addf %99, %104 : vector<8x128xf32>
      %c0_88 = arith.constant 0 : index
      %c0_89 = arith.constant 0 : index
      %c148 = arith.constant 148 : index
      %106 = vector.load %arg2[%c0_88, %c0_89, %c148] : memref<1x4x512xbf16, #tpu.memory_space<vmem>>, vector<1x4x128xbf16>
      %107 = vector.shape_cast %106 : vector<1x4x128xbf16> to vector<4x128xbf16>
      %c5_90 = arith.constant 5 : index
      %c0_91 = arith.constant 0 : index
      %c0_92 = arith.constant 0 : index
      %108 = vector.load %arg3[%c5_90, %c0_91, %c0_92] : memref<9x8x4xbf16, #tpu.memory_space<vmem>>, vector<1x8x4xbf16>
      %109 = vector.shape_cast %108 : vector<1x8x4xbf16> to vector<8x4xbf16>
      %cst_93 = arith.constant dense<0.000000e+00> : vector<8x128xf32>
      %110 = tpu.matmul %109, %107, %cst_93 {dimension_numbers = #tpu.dot_dimension_numbers<[1], [0], [0], [1], [0, 0, 1, 1], [], []>} : vector<8x4xbf16>, vector<4x128xbf16>, vector<8x128xf32> -> vector<8x128xf32>
      %111 = arith.addf %105, %110 : vector<8x128xf32>
      %c0_94 = arith.constant 0 : index
      %c0_95 = arith.constant 0 : index
      %c164 = arith.constant 164 : index
      %112 = vector.load %arg2[%c0_94, %c0_95, %c164] : memref<1x4x512xbf16, #tpu.memory_space<vmem>>, vector<1x4x128xbf16>
      %113 = vector.shape_cast %112 : vector<1x4x128xbf16> to vector<4x128xbf16>
      %c6_96 = arith.constant 6 : index
      %c0_97 = arith.constant 0 : index
      %c0_98 = arith.constant 0 : index
      %114 = vector.load %arg3[%c6_96, %c0_97, %c0_98] : memref<9x8x4xbf16, #tpu.memory_space<vmem>>, vector<1x8x4xbf16>
      %115 = vector.shape_cast %114 : vector<1x8x4xbf16> to vector<8x4xbf16>
      %cst_99 = arith.constant dense<0.000000e+00> : vector<8x128xf32>
      %116 = tpu.matmul %115, %113, %cst_99 {dimension_numbers = #tpu.dot_dimension_numbers<[1], [0], [0], [1], [0, 0, 1, 1], [], []>} : vector<8x4xbf16>, vector<4x128xbf16>, vector<8x128xf32> -> vector<8x128xf32>
      %117 = arith.addf %111, %116 : vector<8x128xf32>
      %c0_100 = arith.constant 0 : index
      %c0_101 = arith.constant 0 : index
      %c165 = arith.constant 165 : index
      %118 = vector.load %arg2[%c0_100, %c0_101, %c165] : memref<1x4x512xbf16, #tpu.memory_space<vmem>>, vector<1x4x128xbf16>
      %119 = vector.shape_cast %118 : vector<1x4x128xbf16> to vector<4x128xbf16>
      %c7_102 = arith.constant 7 : index
      %c0_103 = arith.constant 0 : index
      %c0_104 = arith.constant 0 : index
      %120 = vector.load %arg3[%c7_102, %c0_103, %c0_104] : memref<9x8x4xbf16, #tpu.memory_space<vmem>>, vector<1x8x4xbf16>
      %121 = vector.shape_cast %120 : vector<1x8x4xbf16> to vector<8x4xbf16>
      %cst_105 = arith.constant dense<0.000000e+00> : vector<8x128xf32>
      %122 = tpu.matmul %121, %119, %cst_105 {dimension_numbers = #tpu.dot_dimension_numbers<[1], [0], [0], [1], [0, 0, 1, 1], [], []>} : vector<8x4xbf16>, vector<4x128xbf16>, vector<8x128xf32> -> vector<8x128xf32>
      %123 = arith.addf %117, %122 : vector<8x128xf32>
      %c0_106 = arith.constant 0 : index
      %c0_107 = arith.constant 0 : index
      %c166 = arith.constant 166 : index
      %124 = vector.load %arg2[%c0_106, %c0_107, %c166] : memref<1x4x512xbf16, #tpu.memory_space<vmem>>, vector<1x4x128xbf16>
      %125 = vector.shape_cast %124 : vector<1x4x128xbf16> to vector<4x128xbf16>
      %c8_108 = arith.constant 8 : index
      %c0_109 = arith.constant 0 : index
      %c0_110 = arith.constant 0 : index
      %126 = vector.load %arg3[%c8_108, %c0_109, %c0_110] : memref<9x8x4xbf16, #tpu.memory_space<vmem>>, vector<1x8x4xbf16>
      %127 = vector.shape_cast %126 : vector<1x8x4xbf16> to vector<8x4xbf16>
      %cst_111 = arith.constant dense<0.000000e+00> : vector<8x128xf32>
      %128 = tpu.matmul %127, %125, %cst_111 {dimension_numbers = #tpu.dot_dimension_numbers<[1], [0], [0], [1], [0, 0, 1, 1], [], []>} : vector<8x4xbf16>, vector<4x128xbf16>, vector<8x128xf32> -> vector<8x128xf32>
      %129 = arith.addf %123, %128 : vector<8x128xf32>
      %c3_i32_112 = arith.constant 3 : i32
      %130 = arith.muli %arg1, %c3_i32_112 : i32
      %c1_i32_113 = arith.constant 1 : i32
      %131 = arith.addi %130, %c1_i32_113 : i32
      %132 = arith.index_cast %131 : i32 to index
      %c0_114 = arith.constant 0 : index
      %c0_115 = arith.constant 0 : index
      %133 = vector.load %arg12[%132, %c0_114, %c0_115] : memref<6x8x128xf32, #tpu.memory_space<vmem>>, vector<1x8x128xf32>
      %134 = vector.shape_cast %133 : vector<1x8x128xf32> to vector<8x128xf32>
      %135 = vector.shape_cast %129 : vector<8x128xf32> to vector<1x8x128xf32>
      tpu.vector_store %arg12[%132, %c0_114, %c0_115], %135 {strides = array<i32>} : memref<6x8x128xf32, #tpu.memory_space<vmem>>, vector<1x8x128xf32>,
      %c0_116 = arith.constant 0 : index
      %c128_117 = arith.constant 128 : index
      %136 = vector.load %arg4[%c0_116, %c128_117] : memref<1x384xf32, #tpu.memory_space<vmem>>, vector<1x128xf32>
      %137 = vector.broadcast %136 : vector<1x128xf32> to vector<8x128xf32>
      %138 = arith.mulf %129, %137 : vector<8x128xf32>
      %139 = arith.mulf %129, %138 : vector<8x128xf32>
      %140 = arith.addf %73, %138 : vector<8x128xf32>
      %141 = arith.addf %74, %139 : vector<8x128xf32>
      %cst_118 = arith.constant 0.000000e+00 : f32
      %142 = vector.broadcast %cst_118 : f32 to vector<8x128xf32>
      %c0_119 = arith.constant 0 : index
      %c0_120 = arith.constant 0 : index
      %c256 = arith.constant 256 : index
      %143 = vector.load %arg2[%c0_119, %c0_120, %c256] : memref<1x4x512xbf16, #tpu.memory_space<vmem>>, vector<1x4x128xbf16>
      %144 = vector.shape_cast %143 : vector<1x4x128xbf16> to vector<4x128xbf16>
      %c0_121 = arith.constant 0 : index
      %c0_122 = arith.constant 0 : index
      %c0_123 = arith.constant 0 : index
      %145 = vector.load %arg3[%c0_121, %c0_122, %c0_123] : memref<9x8x4xbf16, #tpu.memory_space<vmem>>, vector<1x8x4xbf16>
      %146 = vector.shape_cast %145 : vector<1x8x4xbf16> to vector<8x4xbf16>
      %cst_124 = arith.constant dense<0.000000e+00> : vector<8x128xf32>
      %147 = tpu.matmul %146, %144, %cst_124 {dimension_numbers = #tpu.dot_dimension_numbers<[1], [0], [0], [1], [0, 0, 1, 1], [], []>} : vector<8x4xbf16>, vector<4x128xbf16>, vector<8x128xf32> -> vector<8x128xf32>
      %148 = arith.addf %142, %147 : vector<8x128xf32>
      %c0_125 = arith.constant 0 : index
      %c0_126 = arith.constant 0 : index
      %c257 = arith.constant 257 : index
      %149 = vector.load %arg2[%c0_125, %c0_126, %c257] : memref<1x4x512xbf16, #tpu.memory_space<vmem>>, vector<1x4x128xbf16>
      %150 = vector.shape_cast %149 : vector<1x4x128xbf16> to vector<4x128xbf16>
      %c1_127 = arith.constant 1 : index
      %c0_128 = arith.constant 0 : index
      %c0_129 = arith.constant 0 : index
      %151 = vector.load %arg3[%c1_127, %c0_128, %c0_129] : memref<9x8x4xbf16, #tpu.memory_space<vmem>>, vector<1x8x4xbf16>
      %152 = vector.shape_cast %151 : vector<1x8x4xbf16> to vector<8x4xbf16>
      %cst_130 = arith.constant dense<0.000000e+00> : vector<8x128xf32>
      %153 = tpu.matmul %152, %150, %cst_130 {dimension_numbers = #tpu.dot_dimension_numbers<[1], [0], [0], [1], [0, 0, 1, 1], [], []>} : vector<8x4xbf16>, vector<4x128xbf16>, vector<8x128xf32> -> vector<8x128xf32>
      %154 = arith.addf %148, %153 : vector<8x128xf32>
      %c0_131 = arith.constant 0 : index
      %c0_132 = arith.constant 0 : index
      %c258 = arith.constant 258 : index
      %155 = vector.load %arg2[%c0_131, %c0_132, %c258] : memref<1x4x512xbf16, #tpu.memory_space<vmem>>, vector<1x4x128xbf16>
      %156 = vector.shape_cast %155 : vector<1x4x128xbf16> to vector<4x128xbf16>
      %c2_133 = arith.constant 2 : index
      %c0_134 = arith.constant 0 : index
      %c0_135 = arith.constant 0 : index
      %157 = vector.load %arg3[%c2_133, %c0_134, %c0_135] : memref<9x8x4xbf16, #tpu.memory_space<vmem>>, vector<1x8x4xbf16>
      %158 = vector.shape_cast %157 : vector<1x8x4xbf16> to vector<8x4xbf16>
      %cst_136 = arith.constant dense<0.000000e+00> : vector<8x128xf32>
      %159 = tpu.matmul %158, %156, %cst_136 {dimension_numbers = #tpu.dot_dimension_numbers<[1], [0], [0], [1], [0, 0, 1, 1], [], []>} : vector<8x4xbf16>, vector<4x128xbf16>, vector<8x128xf32> -> vector<8x128xf32>
      %160 = arith.addf %154, %159 : vector<8x128xf32>
      %c0_137 = arith.constant 0 : index
      %c0_138 = arith.constant 0 : index
      %c274 = arith.constant 274 : index
      %161 = vector.load %arg2[%c0_137, %c0_138, %c274] : memref<1x4x512xbf16, #tpu.memory_space<vmem>>, vector<1x4x128xbf16>
      %162 = vector.shape_cast %161 : vector<1x4x128xbf16> to vector<4x128xbf16>
      %c3_139 = arith.constant 3 : index
      %c0_140 = arith.constant 0 : index
      %c0_141 = arith.constant 0 : index
      %163 = vector.load %arg3[%c3_139, %c0_140, %c0_141] : memref<9x8x4xbf16, #tpu.memory_space<vmem>>, vector<1x8x4xbf16>
      %164 = vector.shape_cast %163 : vector<1x8x4xbf16> to vector<8x4xbf16>
      %cst_142 = arith.constant dense<0.000000e+00> : vector<8x128xf32>
      %165 = tpu.matmul %164, %162, %cst_142 {dimension_numbers = #tpu.dot_dimension_numbers<[1], [0], [0], [1], [0, 0, 1, 1], [], []>} : vector<8x4xbf16>, vector<4x128xbf16>, vector<8x128xf32> -> vector<8x128xf32>
      %166 = arith.addf %160, %165 : vector<8x128xf32>
      %c0_143 = arith.constant 0 : index
      %c0_144 = arith.constant 0 : index
      %c275 = arith.constant 275 : index
      %167 = vector.load %arg2[%c0_143, %c0_144, %c275] : memref<1x4x512xbf16, #tpu.memory_space<vmem>>, vector<1x4x128xbf16>
      %168 = vector.shape_cast %167 : vector<1x4x128xbf16> to vector<4x128xbf16>
      %c4_145 = arith.constant 4 : index
      %c0_146 = arith.constant 0 : index
      %c0_147 = arith.constant 0 : index
      %169 = vector.load %arg3[%c4_145, %c0_146, %c0_147] : memref<9x8x4xbf16, #tpu.memory_space<vmem>>, vector<1x8x4xbf16>
      %170 = vector.shape_cast %169 : vector<1x8x4xbf16> to vector<8x4xbf16>
      %cst_148 = arith.constant dense<0.000000e+00> : vector<8x128xf32>
      %171 = tpu.matmul %170, %168, %cst_148 {dimension_numbers = #tpu.dot_dimension_numbers<[1], [0], [0], [1], [0, 0, 1, 1], [], []>} : vector<8x4xbf16>, vector<4x128xbf16>, vector<8x128xf32> -> vector<8x128xf32>
      %172 = arith.addf %166, %171 : vector<8x128xf32>
      %c0_149 = arith.constant 0 : index
      %c0_150 = arith.constant 0 : index
      %c276 = arith.constant 276 : index
      %173 = vector.load %arg2[%c0_149, %c0_150, %c276] : memref<1x4x512xbf16, #tpu.memory_space<vmem>>, vector<1x4x128xbf16>
      %174 = vector.shape_cast %173 : vector<1x4x128xbf16> to vector<4x128xbf16>
      %c5_151 = arith.constant 5 : index
      %c0_152 = arith.constant 0 : index
      %c0_153 = arith.constant 0 : index
      %175 = vector.load %arg3[%c5_151, %c0_152, %c0_153] : memref<9x8x4xbf16, #tpu.memory_space<vmem>>, vector<1x8x4xbf16>
      %176 = vector.shape_cast %175 : vector<1x8x4xbf16> to vector<8x4xbf16>
      %cst_154 = arith.constant dense<0.000000e+00> : vector<8x128xf32>
      %177 = tpu.matmul %176, %174, %cst_154 {dimension_numbers = #tpu.dot_dimension_numbers<[1], [0], [0], [1], [0, 0, 1, 1], [], []>} : vector<8x4xbf16>, vector<4x128xbf16>, vector<8x128xf32> -> vector<8x128xf32>
      %178 = arith.addf %172, %177 : vector<8x128xf32>
      %c0_155 = arith.constant 0 : index
      %c0_156 = arith.constant 0 : index
      %c292 = arith.constant 292 : index
      %179 = vector.load %arg2[%c0_155, %c0_156, %c292] : memref<1x4x512xbf16, #tpu.memory_space<vmem>>, vector<1x4x128xbf16>
      %180 = vector.shape_cast %179 : vector<1x4x128xbf16> to vector<4x128xbf16>
      %c6_157 = arith.constant 6 : index
      %c0_158 = arith.constant 0 : index
      %c0_159 = arith.constant 0 : index
      %181 = vector.load %arg3[%c6_157, %c0_158, %c0_159] : memref<9x8x4xbf16, #tpu.memory_space<vmem>>, vector<1x8x4xbf16>
      %182 = vector.shape_cast %181 : vector<1x8x4xbf16> to vector<8x4xbf16>
      %cst_160 = arith.constant dense<0.000000e+00> : vector<8x128xf32>
      %183 = tpu.matmul %182, %180, %cst_160 {dimension_numbers = #tpu.dot_dimension_numbers<[1], [0], [0], [1], [0, 0, 1, 1], [], []>} : vector<8x4xbf16>, vector<4x128xbf16>, vector<8x128xf32> -> vector<8x128xf32>
      %184 = arith.addf %178, %183 : vector<8x128xf32>
      %c0_161 = arith.constant 0 : index
      %c0_162 = arith.constant 0 : index
      %c293 = arith.constant 293 : index
      %185 = vector.load %arg2[%c0_161, %c0_162, %c293] : memref<1x4x512xbf16, #tpu.memory_space<vmem>>, vector<1x4x128xbf16>
      %186 = vector.shape_cast %185 : vector<1x4x128xbf16> to vector<4x128xbf16>
      %c7_163 = arith.constant 7 : index
      %c0_164 = arith.constant 0 : index
      %c0_165 = arith.constant 0 : index
      %187 = vector.load %arg3[%c7_163, %c0_164, %c0_165] : memref<9x8x4xbf16, #tpu.memory_space<vmem>>, vector<1x8x4xbf16>
      %188 = vector.shape_cast %187 : vector<1x8x4xbf16> to vector<8x4xbf16>
      %cst_166 = arith.constant dense<0.000000e+00> : vector<8x128xf32>
      %189 = tpu.matmul %188, %186, %cst_166 {dimension_numbers = #tpu.dot_dimension_numbers<[1], [0], [0], [1], [0, 0, 1, 1], [], []>} : vector<8x4xbf16>, vector<4x128xbf16>, vector<8x128xf32> -> vector<8x128xf32>
      %190 = arith.addf %184, %189 : vector<8x128xf32>
      %c0_167 = arith.constant 0 : index
      %c0_168 = arith.constant 0 : index
      %c294 = arith.constant 294 : index
      %191 = vector.load %arg2[%c0_167, %c0_168, %c294] : memref<1x4x512xbf16, #tpu.memory_space<vmem>>, vector<1x4x128xbf16>
      %192 = vector.shape_cast %191 : vector<1x4x128xbf16> to vector<4x128xbf16>
      %c8_169 = arith.constant 8 : index
      %c0_170 = arith.constant 0 : index
      %c0_171 = arith.constant 0 : index
      %193 = vector.load %arg3[%c8_169, %c0_170, %c0_171] : memref<9x8x4xbf16, #tpu.memory_space<vmem>>, vector<1x8x4xbf16>
      %194 = vector.shape_cast %193 : vector<1x8x4xbf16> to vector<8x4xbf16>
      %cst_172 = arith.constant dense<0.000000e+00> : vector<8x128xf32>
      %195 = tpu.matmul %194, %192, %cst_172 {dimension_numbers = #tpu.dot_dimension_numbers<[1], [0], [0], [1], [0, 0, 1, 1], [], []>} : vector<8x4xbf16>, vector<4x128xbf16>, vector<8x128xf32> -> vector<8x128xf32>
      %196 = arith.addf %190, %195 : vector<8x128xf32>
      %c3_i32_173 = arith.constant 3 : i32
      %197 = arith.muli %arg1, %c3_i32_173 : i32
      %c2_i32 = arith.constant 2 : i32
      %198 = arith.addi %197, %c2_i32 : i32
      %199 = arith.index_cast %198 : i32 to index
      %c0_174 = arith.constant 0 : index
      %c0_175 = arith.constant 0 : index
      %200 = vector.load %arg12[%199, %c0_174, %c0_175] : memref<6x8x128xf32, #tpu.memory_space<vmem>>, vector<1x8x128xf32>
      %201 = vector.shape_cast %200 : vector<1x8x128xf32> to vector<8x128xf32>
      %202 = vector.shape_cast %196 : vector<8x128xf32> to vector<1x8x128xf32>
      tpu.vector_store %arg12[%199, %c0_174, %c0_175], %202 {strides = array<i32>} : memref<6x8x128xf32, #tpu.memory_space<vmem>>, vector<1x8x128xf32>,
      %c0_176 = arith.constant 0 : index
      %c256_177 = arith.constant 256 : index
      %203 = vector.load %arg4[%c0_176, %c256_177] : memref<1x384xf32, #tpu.memory_space<vmem>>, vector<1x128xf32>
      %204 = vector.broadcast %203 : vector<1x128xf32> to vector<8x128xf32>
      %205 = arith.mulf %196, %204 : vector<8x128xf32>
      %206 = arith.mulf %196, %205 : vector<8x128xf32>
      %207 = arith.addf %140, %205 : vector<8x128xf32>
      %208 = arith.addf %141, %206 : vector<8x128xf32>
      %c0_i32_178 = arith.constant 0 : i32
      %209 = arith.cmpi eq, %arg1, %c0_i32_178 : i32
      %210 = arith.extui %209 : i1 to i32
      %c0_i32_179 = arith.constant 0 : i32
      %211 = arith.cmpi ne, %210, %c0_i32_179 : i32
      scf.if %211 {
        %c0_182 = arith.constant 0 : index
        %c0_183 = arith.constant 0 : index
        %215 = vector.load %arg8[%c0_182, %c0_183] : memref<8x128xf32, #tpu.memory_space<vmem>>, vector<8x128xf32>
        tpu.vector_store %arg8[%c0_182, %c0_183], %207 {strides = array<i32>} : memref<8x128xf32, #tpu.memory_space<vmem>>, vector<8x128xf32>,
        %c0_184 = arith.constant 0 : index
        %c0_185 = arith.constant 0 : index
        %216 = vector.load %arg9[%c0_184, %c0_185] : memref<8x128xf32, #tpu.memory_space<vmem>>, vector<8x128xf32>
        tpu.vector_store %arg9[%c0_184, %c0_185], %208 {strides = array<i32>} : memref<8x128xf32, #tpu.memory_space<vmem>>, vector<8x128xf32>,
      } else {
      }
      %c0_i32_180 = arith.constant 0 : i32
      %212 = arith.cmpi sgt, %arg1, %c0_i32_180 : i32
      %213 = arith.extui %212 : i1 to i32
      %c0_i32_181 = arith.constant 0 : i32
      %214 = arith.cmpi ne, %213, %c0_i32_181 : i32
      scf.if %214 {
        %c0_182 = arith.constant 0 : index
        %c0_183 = arith.constant 0 : index
        %215 = vector.load %arg8[%c0_182, %c0_183] : memref<8x128xf32, #tpu.memory_space<vmem>>, vector<8x128xf32>
        %216 = arith.addf %215, %207 : vector<8x128xf32>
        %c0_184 = arith.constant 0 : index
        %c0_185 = arith.constant 0 : index
        %217 = vector.load %arg8[%c0_184, %c0_185] : memref<8x128xf32, #tpu.memory_space<vmem>>, vector<8x128xf32>
        tpu.vector_store %arg8[%c0_184, %c0_185], %216 {strides = array<i32>} : memref<8x128xf32, #tpu.memory_space<vmem>>, vector<8x128xf32>,
        %c0_186 = arith.constant 0 : index
        %c0_187 = arith.constant 0 : index
        %218 = vector.load %arg9[%c0_186, %c0_187] : memref<8x128xf32, #tpu.memory_space<vmem>>, vector<8x128xf32>
        %219 = arith.addf %218, %208 : vector<8x128xf32>
        %c0_188 = arith.constant 0 : index
        %c0_189 = arith.constant 0 : index
        %220 = vector.load %arg9[%c0_188, %c0_189] : memref<8x128xf32, #tpu.memory_space<vmem>>, vector<8x128xf32>
        tpu.vector_store %arg9[%c0_188, %c0_189], %219 {strides = array<i32>} : memref<8x128xf32, #tpu.memory_space<vmem>>, vector<8x128xf32>,
      } else {
      }
    } else {
    }
    %c1_i32 = arith.constant 1 : i32
    %3 = arith.cmpi eq, %arg0, %c1_i32 : i32
    %4 = arith.extui %3 : i1 to i32
    %c0_i32_1 = arith.constant 0 : i32
    %5 = arith.cmpi ne, %4, %c0_i32_1 : i32
    scf.if %5 {
      %c0_i32_2 = arith.constant 0 : i32
      %6 = arith.cmpi eq, %arg1, %c0_i32_2 : i32
      %7 = arith.extui %6 : i1 to i32
      %c0_i32_3 = arith.constant 0 : i32
      %8 = arith.cmpi ne, %7, %c0_i32_3 : i32
      scf.if %8 {
        %c0_35 = arith.constant 0 : index
        %c0_36 = arith.constant 0 : index
        %86 = vector.load %arg8[%c0_35, %c0_36] : memref<8x128xf32, #tpu.memory_space<vmem>>, vector<8x128xf32>
        %cst_37 = arith.constant dense<0.000000e+00> : vector<8xf32>
        %87 = vector.multi_reduction <add>, %86, %cst_37 [1] : vector<8x128xf32> to vector<8xf32>
        %88 = vector.shape_cast %87 : vector<8xf32> to vector<8x1xf32>
        %c0_38 = arith.constant 0 : index
        %c0_39 = arith.constant 0 : index
        %89 = vector.load %arg9[%c0_38, %c0_39] : memref<8x128xf32, #tpu.memory_space<vmem>>, vector<8x128xf32>
        %cst_40 = arith.constant dense<0.000000e+00> : vector<8xf32>
        %90 = vector.multi_reduction <add>, %89, %cst_40 [1] : vector<8x128xf32> to vector<8xf32>
        %91 = vector.shape_cast %90 : vector<8xf32> to vector<8x1xf32>
        %cst_41 = arith.constant 0.001953125 : f32
        %92 = vector.broadcast %cst_41 : f32 to vector<8x1xf32>
        %93 = arith.mulf %88, %92 : vector<8x1xf32>
        %cst_42 = arith.constant 0.001953125 : f32
        %94 = vector.broadcast %cst_42 : f32 to vector<8x1xf32>
        %95 = arith.mulf %91, %94 : vector<8x1xf32>
        %96 = arith.mulf %93, %93 : vector<8x1xf32>
        %97 = arith.subf %95, %96 : vector<8x1xf32>
        %cst_43 = arith.constant 0.000000e+00 : f32
        %98 = vector.broadcast %cst_43 : f32 to vector<8x1xf32>
        %99 = arith.maximumf %97, %98 : vector<8x1xf32>
        %c0_44 = arith.constant 0 : index
        %c0_45 = arith.constant 0 : index
        %100 = vector.load %arg5[%c0_44, %c0_45] : memref<8x1xf32, #tpu.memory_space<vmem>>, vector<8x1xf32>
        %cst_46 = arith.constant 9.99999974E-6 : f32
        %101 = vector.broadcast %cst_46 : f32 to vector<8x1xf32>
        %102 = arith.addf %99, %101 : vector<8x1xf32>
        %103 = math.rsqrt %102 : vector<8x1xf32>
        %104 = arith.mulf %100, %103 : vector<8x1xf32>
        %c0_47 = arith.constant 0 : index
        %c0_48 = arith.constant 0 : index
        %105 = vector.load %arg10[%c0_47, %c0_48] : memref<8x1xf32, #tpu.memory_space<vmem>>, vector<8x1xf32>
        tpu.vector_store %arg10[%c0_47, %c0_48], %104 {strides = array<i32>} : memref<8x1xf32, #tpu.memory_space<vmem>>, vector<8x1xf32>,
        %c0_49 = arith.constant 0 : index
        %c0_50 = arith.constant 0 : index
        %106 = vector.load %arg6[%c0_49, %c0_50] : memref<8x1xf32, #tpu.memory_space<vmem>>, vector<8x1xf32>
        %107 = arith.mulf %93, %104 : vector<8x1xf32>
        %108 = arith.subf %106, %107 : vector<8x1xf32>
        %c0_51 = arith.constant 0 : index
        %c0_52 = arith.constant 0 : index
        %109 = vector.load %arg11[%c0_51, %c0_52] : memref<8x1xf32, #tpu.memory_space<vmem>>, vector<8x1xf32>
        tpu.vector_store %arg11[%c0_51, %c0_52], %108 {strides = array<i32>} : memref<8x1xf32, #tpu.memory_space<vmem>>, vector<8x1xf32>,
      } else {
      }
      %c0 = arith.constant 0 : index
      %c0_4 = arith.constant 0 : index
      %9 = vector.load %arg10[%c0, %c0_4] : memref<8x1xf32, #tpu.memory_space<vmem>>, vector<8x1xf32>
      %c0_5 = arith.constant 0 : index
      %c0_6 = arith.constant 0 : index
      %10 = vector.load %arg11[%c0_5, %c0_6] : memref<8x1xf32, #tpu.memory_space<vmem>>, vector<8x1xf32>
      %c3_i32 = arith.constant 3 : i32
      %11 = arith.muli %arg1, %c3_i32 : i32
      %c0_i32_7 = arith.constant 0 : i32
      %12 = arith.addi %11, %c0_i32_7 : i32
      %13 = arith.index_cast %12 : i32 to index
      %c0_8 = arith.constant 0 : index
      %c0_9 = arith.constant 0 : index
      %14 = vector.load %arg12[%13, %c0_8, %c0_9] : memref<6x8x128xf32, #tpu.memory_space<vmem>>, vector<1x8x128xf32>
      %15 = vector.shape_cast %14 : vector<1x8x128xf32> to vector<8x128xf32>
      %16 = vector.broadcast %9 : vector<8x1xf32> to vector<8x128xf32>
      %17 = arith.mulf %15, %16 : vector<8x128xf32>
      %18 = vector.broadcast %10 : vector<8x1xf32> to vector<8x128xf32>
      %19 = arith.addf %17, %18 : vector<8x128xf32>
      %cst = arith.constant 5.000000e-01 : f32
      %20 = vector.broadcast %cst : f32 to vector<8x128xf32>
      %21 = arith.mulf %20, %19 : vector<8x128xf32>
      %cst_10 = arith.constant 4.471500e-02 : f32
      %22 = vector.broadcast %cst_10 : f32 to vector<8x128xf32>
      %23 = arith.mulf %22, %19 : vector<8x128xf32>
      %24 = arith.mulf %23, %19 : vector<8x128xf32>
      %25 = arith.mulf %24, %19 : vector<8x128xf32>
      %26 = arith.addf %19, %25 : vector<8x128xf32>
      %cst_11 = arith.constant 0.797884583 : f32
      %27 = vector.broadcast %cst_11 : f32 to vector<8x128xf32>
      %28 = arith.mulf %27, %26 : vector<8x128xf32>
      %29 = math.tanh %28 : vector<8x128xf32>
      %cst_12 = arith.constant 1.000000e+00 : f32
      %30 = vector.broadcast %cst_12 : f32 to vector<8x128xf32>
      %31 = arith.addf %30, %29 : vector<8x128xf32>
      %32 = arith.mulf %21, %31 : vector<8x128xf32>
      %c0_13 = arith.constant 0 : index
      %c0_14 = arith.constant 0 : index
      %c0_15 = arith.constant 0 : index
      %33 = vector.load %arg7[%c0_13, %c0_14, %c0_15] : memref<1x8x384xf32, #tpu.memory_space<vmem>>, vector<1x8x128xf32>
      %34 = vector.shape_cast %33 : vector<1x8x128xf32> to vector<8x128xf32>
      %35 = vector.shape_cast %32 : vector<8x128xf32> to vector<1x8x128xf32>
      tpu.vector_store %arg7[%c0_13, %c0_14, %c0_15], %35 {strides = array<i32>} : memref<1x8x384xf32, #tpu.memory_space<vmem>>, vector<1x8x128xf32>,
      %c3_i32_16 = arith.constant 3 : i32
      %36 = arith.muli %arg1, %c3_i32_16 : i32
      %c1_i32_17 = arith.constant 1 : i32
      %37 = arith.addi %36, %c1_i32_17 : i32
      %38 = arith.index_cast %37 : i32 to index
      %c0_18 = arith.constant 0 : index
      %c0_19 = arith.constant 0 : index
      %39 = vector.load %arg12[%38, %c0_18, %c0_19] : memref<6x8x128xf32, #tpu.memory_space<vmem>>, vector<1x8x128xf32>
      %40 = vector.shape_cast %39 : vector<1x8x128xf32> to vector<8x128xf32>
      %41 = vector.broadcast %9 : vector<8x1xf32> to vector<8x128xf32>
      %42 = arith.mulf %40, %41 : vector<8x128xf32>
      %43 = vector.broadcast %10 : vector<8x1xf32> to vector<8x128xf32>
      %44 = arith.addf %42, %43 : vector<8x128xf32>
      %cst_20 = arith.constant 5.000000e-01 : f32
      %45 = vector.broadcast %cst_20 : f32 to vector<8x128xf32>
      %46 = arith.mulf %45, %44 : vector<8x128xf32>
      %cst_21 = arith.constant 4.471500e-02 : f32
      %47 = vector.broadcast %cst_21 : f32 to vector<8x128xf32>
      %48 = arith.mulf %47, %44 : vector<8x128xf32>
      %49 = arith.mulf %48, %44 : vector<8x128xf32>
      %50 = arith.mulf %49, %44 : vector<8x128xf32>
      %51 = arith.addf %44, %50 : vector<8x128xf32>
      %cst_22 = arith.constant 0.797884583 : f32
      %52 = vector.broadcast %cst_22 : f32 to vector<8x128xf32>
      %53 = arith.mulf %52, %51 : vector<8x128xf32>
      %54 = math.tanh %53 : vector<8x128xf32>
      %cst_23 = arith.constant 1.000000e+00 : f32
      %55 = vector.broadcast %cst_23 : f32 to vector<8x128xf32>
      %56 = arith.addf %55, %54 : vector<8x128xf32>
      %57 = arith.mulf %46, %56 : vector<8x128xf32>
      %c0_24 = arith.constant 0 : index
      %c0_25 = arith.constant 0 : index
      %c128 = arith.constant 128 : index
      %58 = vector.load %arg7[%c0_24, %c0_25, %c128] : memref<1x8x384xf32, #tpu.memory_space<vmem>>, vector<1x8x128xf32>
      %59 = vector.shape_cast %58 : vector<1x8x128xf32> to vector<8x128xf32>
      %60 = vector.shape_cast %57 : vector<8x128xf32> to vector<1x8x128xf32>
      tpu.vector_store %arg7[%c0_24, %c0_25, %c128], %60 {strides = array<i32>} : memref<1x8x384xf32, #tpu.memory_space<vmem>>, vector<1x8x128xf32>,
      %c3_i32_26 = arith.constant 3 : i32
      %61 = arith.muli %arg1, %c3_i32_26 : i32
      %c2_i32 = arith.constant 2 : i32
      %62 = arith.addi %61, %c2_i32 : i32
      %63 = arith.index_cast %62 : i32 to index
      %c0_27 = arith.constant 0 : index
      %c0_28 = arith.constant 0 : index
      %64 = vector.load %arg12[%63, %c0_27, %c0_28] : memref<6x8x128xf32, #tpu.memory_space<vmem>>, vector<1x8x128xf32>
      %65 = vector.shape_cast %64 : vector<1x8x128xf32> to vector<8x128xf32>
      %66 = vector.broadcast %9 : vector<8x1xf32> to vector<8x128xf32>
      %67 = arith.mulf %65, %66 : vector<8x128xf32>
      %68 = vector.broadcast %10 : vector<8x1xf32> to vector<8x128xf32>
      %69 = arith.addf %67, %68 : vector<8x128xf32>
      %cst_29 = arith.constant 5.000000e-01 : f32
      %70 = vector.broadcast %cst_29 : f32 to vector<8x128xf32>
      %71 = arith.mulf %70, %69 : vector<8x128xf32>
      %cst_30 = arith.constant 4.471500e-02 : f32
      %72 = vector.broadcast %cst_30 : f32 to vector<8x128xf32>
      %73 = arith.mulf %72, %69 : vector<8x128xf32>
      %74 = arith.mulf %73, %69 : vector<8x128xf32>
      %75 = arith.mulf %74, %69 : vector<8x128xf32>
      %76 = arith.addf %69, %75 : vector<8x128xf32>
      %cst_31 = arith.constant 0.797884583 : f32
      %77 = vector.broadcast %cst_31 : f32 to vector<8x128xf32>
      %78 = arith.mulf %77, %76 : vector<8x128xf32>
      %79 = math.tanh %78 : vector<8x128xf32>
      %cst_32 = arith.constant 1.000000e+00 : f32
      %80 = vector.broadcast %cst_32 : f32 to vector<8x128xf32>
      %81 = arith.addf %80, %79 : vector<8x128xf32>
      %82 = arith.mulf %71, %81 : vector<8x128xf32>
      %c0_33 = arith.constant 0 : index
      %c0_34 = arith.constant 0 : index
      %c256 = arith.constant 256 : index
      %83 = vector.load %arg7[%c0_33, %c0_34, %c256] : memref<1x8x384xf32, #tpu.memory_space<vmem>>, vector<1x8x128xf32>
      %84 = vector.shape_cast %83 : vector<1x8x128xf32> to vector<8x128xf32>
      %85 = vector.shape_cast %82 : vector<8x128xf32> to vector<1x8x128xf32>
      tpu.vector_store %arg7[%c0_33, %c0_34, %c256], %85 {strides = array<i32>} : memref<1x8x384xf32, #tpu.memory_space<vmem>>, vector<1x8x128xf32>,
    } else {
    }
    return
  }
  func.func @transform_0(%arg0: i32, %arg1: i32) -> (i32, i32, i32) {
    %c1_i32 = arith.constant 1 : i32
    %0 = arith.subi %c1_i32, %arg0 : i32
    %1 = arith.muli %arg1, %0 : i32
    %c1_i32_0 = arith.constant 1 : i32
    %2 = arith.muli %c1_i32_0, %arg0 : i32
    %3 = arith.addi %1, %2 : i32
    %c0_i32 = arith.constant 0 : i32
    %c0_i32_1 = arith.constant 0 : i32
    %c0_i32_2 = arith.constant 0 : i32
    return %3, %c0_i32, %c0_i32_1 : i32, i32, i32
  }
  func.func @transform_1(%arg0: i32, %arg1: i32) -> (i32, i32, i32) {
    %c0_i32 = arith.constant 0 : i32
    %c0_i32_0 = arith.constant 0 : i32
    %c0_i32_1 = arith.constant 0 : i32
    %c0_i32_2 = arith.constant 0 : i32
    return %c0_i32, %c0_i32_0, %c0_i32_1 : i32, i32, i32
  }
  func.func @transform_2(%arg0: i32, %arg1: i32) -> (i32, i32) {
    %c0_i32 = arith.constant 0 : i32
    %c0_i32_0 = arith.constant 0 : i32
    %c0_i32_1 = arith.constant 0 : i32
    return %c0_i32, %c0_i32_0 : i32, i32
  }
  func.func @transform_3(%arg0: i32, %arg1: i32) -> (i32, i32) {
    %c0_i32 = arith.constant 0 : i32
    %c0_i32_0 = arith.constant 0 : i32
    %c0_i32_1 = arith.constant 0 : i32
    return %c0_i32, %c0_i32_0 : i32, i32
  }
  func.func @transform_4(%arg0: i32, %arg1: i32) -> (i32, i32) {
    %c0_i32 = arith.constant 0 : i32
    %c0_i32_0 = arith.constant 0 : i32
    %c0_i32_1 = arith.constant 0 : i32
    return %c0_i32, %c0_i32_0 : i32, i32
  }
  func.func @transform_5(%arg0: i32, %arg1: i32) -> (i32, i32, i32) {
    %0 = arith.muli %arg1, %arg0 : i32
    %c0_i32 = arith.constant 0 : i32
    %c0_i32_0 = arith.constant 0 : i32
    %c0_i32_1 = arith.constant 0 : i32
    return %0, %c0_i32, %c0_i32_0 : i32, i32, i32
  }
}

</mosaic_0001>

<llo_original>
// kernel: conv_with_norms.1
$region0: #{conv_with_norms.1}
  #allocation0 [shape = 'u32[]', space=smem, size = 0x4, offset = 0x4, fixed_abs, tag = 'smem constant byte address 0x4 - core index']
  #allocation1 [shape = 'u32[144,128]{1,0:T(1,128)}', space=vmem, size = 0x12000, scoped, tag = 'internal scratch']
  #allocation2 [shape = 'f32[8,128]{1,0:T(8,128)}', space=vmem, size = 0x1000, scoped, tag = 'scratch operand']
  #allocation3 [shape = 'f32[8,128]{1,0:T(8,128)}', space=vmem, size = 0x1000, scoped, tag = 'scratch operand']
  #allocation4 [shape = 'f32[8,1]{1,0:T(8,128)}', space=vmem, size = 0x1000, scoped, tag = 'scratch operand']
  #allocation5 [shape = 'f32[8,1]{1,0:T(8,128)}', space=vmem, size = 0x1000, scoped, tag = 'scratch operand']
  #allocation6 [shape = 'f32[6,8,128]{2,1,0:T(8,128)}', space=vmem, size = 0x6000, scoped, tag = 'scratch operand']
  %s0 = inlined_call_operand.vmem [shape: bf16[2,4,512], index: 0, kind: input, shape index: {}]
  %s1 = inlined_call_operand.vmem [shape: bf16[9,8,4], index: 1, kind: input, shape index: {}]
  %s2 = inlined_call_operand.vmem [shape: f32[1,384], index: 2, kind: input, shape index: {}]
  %s3 = inlined_call_operand.vmem [shape: f32[8,1], index: 3, kind: input, shape index: {}]
  %s4 = inlined_call_operand.vmem [shape: f32[8,1], index: 4, kind: input, shape index: {}]
  %s5 = inlined_call_operand.vmem [shape: f32[2,8,384], index: 5, kind: output, shape index: {}]
  %s6 = sld [smem:[#allocation0]]
  $region73: #{conv_with_norms.1} parent=0
    _
  %s8 = ssub.s32 1, %s6
  %s9 = scalar_select 0, %s8, %s6
  loop: start=0, step=1, limit=6
  $region2: #{conv_with_norms.1} parent=0 // loop_pre_header
    _
  $region3: #{conv_with_norms.1} parent=0 // loop_header
    %s11 = sphi 0, %s15
    %p12 = scmp.ge.s32.totalorder %s11, 6
    %s18 = sphi 0, %s30
    %s19 = sphi 0, %s26
    %s20 = sphi 0, %s18
    %s21 = sphi 0, %s19
    %s22 = sphi 0, %s20
    %s23 = sphi 0, %s21
    %s39 = sphi 0, %s41
    %s42 = sphi 0, %s39
    %s43 = sphi 0, %s42
    %s59 = sphi 0, %s43
    %s63 = sphi 0, %s63
    %s65 = sphi 0, %s63
    %s66 = sphi 0, %s65
    %s80 = sphi 0, %s66
    %s84 = sphi 0, %s84
    %s86 = sphi 0, %s84
    %s87 = sphi 0, %s86
    %s101 = sphi 0, %s87
    %s105 = sphi 0, %s105
    %s107 = sphi 0, %s105
    %s108 = sphi 0, %s107
    %s122 = sphi 0, %s108
    %s126 = sphi 0, %s126
    %s128 = sphi 0, %s126
    %s129 = sphi 0, %s128
    %s143 = sphi 0, %s129
    %s151 = sphi 0, %s153
    %s154 = sphi 0, %s151
    %s155 = sphi 0, %s154
    %s171 = sphi 0, %s155
  $region4: #{conv_with_norms.1} parent=0 // loop_header_branch
    %14 = sbr.rel (%p12) target = $region8
  $region5: #{conv_with_norms.1} parent=0 // loop_body
    %s16 = ssub.s32 %s11, 1
    %s17 = ssub.s32 %s11, 2
    %s24 = sadd.s32 1, %s19
    %p25 = scmp.ge.s32.totalorder %s24, 2
    %s26 = scalar_select %p25, 0, %s24
    %s27 = sadd.s32 1, %s18
    %s28 = scalar_select %p25, %s27, %s18
    %p29 = scmp.ge.s32.totalorder %s28, 2
    %s30 = scalar_select %p29, 0, %s28
    %s31 = ssub.s32 1, %s18
    %s32 = smul.u32 %s19, %s31
    %s33 = sadd.s32 %s32, %s18
    %s34 = ssub.s32 1, %s30
    %s35 = smul.u32 %s26, %s34
    %s36 = sadd.s32 %s35, %s30
    %s37 = ssub.s32 %s33, %s36
    %p38 = scmp.eq.s32.totalorder %s37, 0
    %s40 = sadd.s32 %s39, 1
    %s41 = scalar_select %p38, %s39, %s40
    %p44 = pneg %p38
    %p45 = scmp.eq.s32.totalorder %s11, 3
    %p46 = por %p44, %p45
    %p47 = scmp.ne.s32.totalorder %s39, %s42
    %p48 = scmp.eq.s32.totalorder %s11, 0
    %p49 = por %p47, %p48
    %p50 = scmp.ne.s32.totalorder %s39, %s42
    %p51 = scmp.eq.s32.totalorder %s16, 3
    %p52 = por %p50, %p51
    %p53 = scmp.ne.s32.totalorder %s42, %s43
    %p54 = scmp.eq.s32.totalorder %s16, 0
    %p55 = por %p53, %p54
    %p56 = scmp.ne.s32.totalorder %s42, %s43
    %p57 = scmp.eq.s32.totalorder %s17, 3
    %p58 = por %p56, %p57
    %p60 = scmp.ne.s32.totalorder %s43, %s59
    %p61 = scmp.eq.s32.totalorder %s17, 0
    %p62 = por %p60, %p61
    %s64 = sadd.s32 %s63, 1
    %p67 = scmp.eq.s32.totalorder %s11, 3
    %p68 = scmp.ne.s32.totalorder %s63, %s65
    %p69 = scmp.eq.s32.totalorder %s11, 0
    %p70 = por %p68, %p69
    %p71 = scmp.ne.s32.totalorder %s63, %s65
    %p72 = scmp.eq.s32.totalorder %s16, 3
    %p73 = por %p71, %p72
    %p74 = scmp.ne.s32.totalorder %s65, %s66
    %p75 = scmp.eq.s32.totalorder %s16, 0
    %p76 = por %p74, %p75
    %p77 = scmp.ne.s32.totalorder %s65, %s66
    %p78 = scmp.eq.s32.totalorder %s17, 3
    %p79 = por %p77, %p78
    %p81 = scmp.ne.s32.totalorder %s66, %s80
    %p82 = scmp.eq.s32.totalorder %s17, 0
    %p83 = por %p81, %p82
    %s85 = sadd.s32 %s84, 1
    %p88 = scmp.eq.s32.totalorder %s11, 3
    %p89 = scmp.ne.s32.totalorder %s84, %s86
    %p90 = scmp.eq.s32.totalorder %s11, 0
    %p91 = por %p89, %p90
    %p92 = scmp.ne.s32.totalorder %s84, %s86
    %p93 = scmp.eq.s32.totalorder %s16, 3
    %p94 = por %p92, %p93
    %p95 = scmp.ne.s32.totalorder %s86, %s87
    %p96 = scmp.eq.s32.totalorder %s16, 0
    %p97 = por %p95, %p96
    %p98 = scmp.ne.s32.totalorder %s86, %s87
    %p99 = scmp.eq.s32.totalorder %s17, 3
    %p100 = por %p98, %p99
    %p102 = scmp.ne.s32.totalorder %s87, %s101
    %p103 = scmp.eq.s32.totalorder %s17, 0
    %p104 = por %p102, %p103
    %s106 = sadd.s32 %s105, 1
    %p109 = scmp.eq.s32.totalorder %s11, 3
    %p110 = scmp.ne.s32.totalorder %s105, %s107
    %p111 = scmp.eq.s32.totalorder %s11, 0
    %p112 = por %p110, %p111
    %p113 = scmp.ne.s32.totalorder %s105, %s107
    %p114 = scmp.eq.s32.totalorder %s16, 3
    %p115 = por %p113, %p114
    %p116 = scmp.ne.s32.totalorder %s107, %s108
    %p117 = scmp.eq.s32.totalorder %s16, 0
    %p118 = por %p116, %p117
    %p119 = scmp.ne.s32.totalorder %s107, %s108
    %p120 = scmp.eq.s32.totalorder %s17, 3
    %p121 = por %p119, %p120
    %p123 = scmp.ne.s32.totalorder %s108, %s122
    %p124 = scmp.eq.s32.totalorder %s17, 0
    %p125 = por %p123, %p124
    %s127 = sadd.s32 %s126, 1
    %p130 = scmp.eq.s32.totalorder %s11, 3
    %p131 = scmp.ne.s32.totalorder %s126, %s128
    %p132 = scmp.eq.s32.totalorder %s11, 0
    %p133 = por %p131, %p132
    %p134 = scmp.ne.s32.totalorder %s126, %s128
    %p135 = scmp.eq.s32.totalorder %s16, 3
    %p136 = por %p134, %p135
    %p137 = scmp.ne.s32.totalorder %s128, %s129
    %p138 = scmp.eq.s32.totalorder %s16, 0
    %p139 = por %p137, %p138
    %p140 = scmp.ne.s32.totalorder %s128, %s129
    %p141 = scmp.eq.s32.totalorder %s17, 3
    %p142 = por %p140, %p141
    %p144 = scmp.ne.s32.totalorder %s129, %s143
    %p145 = scmp.eq.s32.totalorder %s17, 0
    %p146 = por %p144, %p145
    %s147 = smul.u32 %s19, %s18
    %s148 = smul.u32 %s26, %s30
    %s149 = ssub.s32 %s147, %s148
    %p150 = scmp.eq.s32.totalorder %s149, 0
    %s152 = sadd.s32 %s151, 1
    %s153 = scalar_select %p150, %s151, %s152
    %p156 = pneg %p150
    %p157 = scmp.eq.s32.totalorder %s11, 3
    %p158 = por %p156, %p157
    %p159 = scmp.ne.s32.totalorder %s151, %s154
    %p160 = scmp.eq.s32.totalorder %s11, 0
    %p161 = por %p159, %p160
    %p162 = scmp.ne.s32.totalorder %s151, %s154
    %p163 = scmp.eq.s32.totalorder %s16, 3
    %p164 = por %p162, %p163
    %p165 = scmp.ne.s32.totalorder %s154, %s155
    %p166 = scmp.eq.s32.totalorder %s16, 0
    %p167 = por %p165, %p166
    %p168 = scmp.ne.s32.totalorder %s154, %s155
    %p169 = scmp.eq.s32.totalorder %s17, 3
    %p170 = por %p168, %p169
    %p172 = scmp.ne.s32.totalorder %s155, %s171
    %p173 = scmp.eq.s32.totalorder %s17, 0
    %p174 = por %p172, %p173
    %p175 = scmp.le.s32.totalorder 1, %s11
    %p176 = scmp.lt.s32.totalorder %s11, 5
    %p177 = pnand %p175, %p176
    %p178 = pneg %p177
    // Predicated region
    $region9: #{conv_with_norms.1} parent=5 // pred_check
      _
    $region10: #{conv_with_norms.1} parent=5 // pred_check_branch
      %180 = sbr.rel (%p177) target = $region12
    $region11: #{conv_with_norms.1} parent=5 // pred_region
      %s181 = ssub.s32 %s11, 1
      // Predicated region
      $region13: #{conv_with_norms.1} parent=11 // pred_check
        %p182 = pneg %p76
      $region14: #{conv_with_norms.1} parent=11 // pred_check_branch
        %184 = sbr.rel (%p182) target = $region16
      $region15: #{conv_with_norms.1} parent=11 // pred_region
        _
      $region16: #{conv_with_norms.1} parent=11 // pred_fallthru
        _
      // Predicated region
      $region17: #{conv_with_norms.1} parent=11 // pred_check
        %p185 = pneg %p97
      $region18: #{conv_with_norms.1} parent=11 // pred_check_branch
        %187 = sbr.rel (%p185) target = $region20
      $region19: #{conv_with_norms.1} parent=11 // pred_region
        _
      $region20: #{conv_with_norms.1} parent=11 // pred_fallthru
        _
      // Predicated region
      $region21: #{conv_with_norms.1} parent=11 // pred_check
        %p188 = pneg %p118
      $region22: #{conv_with_norms.1} parent=11 // pred_check_branch
        %190 = sbr.rel (%p188) target = $region24
      $region23: #{conv_with_norms.1} parent=11 // pred_region
        _
      $region24: #{conv_with_norms.1} parent=11 // pred_fallthru
        _
      // Predicated region
      $region25: #{conv_with_norms.1} parent=11 // pred_check
        %p191 = pneg %p139
      $region26: #{conv_with_norms.1} parent=11 // pred_check_branch
        %193 = sbr.rel (%p191) target = $region28
      $region27: #{conv_with_norms.1} parent=11 // pred_region
        _
      $region28: #{conv_with_norms.1} parent=11 // pred_fallthru
        _
    $region12: #{conv_with_norms.1} parent=5 // pred_fallthru
      _
    %p194 = scmp.lt.s32.totalorder %s11, 4
    // Predicated region
    $region29: #{conv_with_norms.1} parent=5 // pred_check
      %p195 = pneg %p194
    $region30: #{conv_with_norms.1} parent=5 // pred_check_branch
      %197 = sbr.rel (%p195) target = $region32
    $region31: #{conv_with_norms.1} parent=5 // pred_region
      // Predicated region
      $region33: #{conv_with_norms.1} parent=31 // pred_check
        %p198 = pneg %p49
      $region34: #{conv_with_norms.1} parent=31 // pred_check_branch
        %200 = sbr.rel (%p198) target = $region36
      $region35: #{conv_with_norms.1} parent=31 // pred_region
        %s201 = ssub.s32 1, %s18
        %s202 = smul.u32 %s19, %s201
        %s203 = sadd.s32 %s202, %s18
        %p204 = scmp.lt.s32.totalorder %s203, 1
        %s205 = scalar_select %p204, %s203, 1
        %s206 = smul.addr %s205, 4
        %s207 = smul.addr %s206, 2
        %s208 = scalar_lea.vmem %s0, %s207
        %s209 = ssub.s32 1, %s18
        %s210 = smul.u32 %s19, %s209
        %s211 = sadd.s32 %s210, %s18
      $region36: #{conv_with_norms.1} parent=31 // pred_fallthru
        _
    $region32: #{conv_with_norms.1} parent=5 // pred_fallthru
      _
    %p212 = scmp.le.s32.totalorder 1, %s11
    %p213 = scmp.lt.s32.totalorder %s11, 5
    %p214 = pnand %p212, %p213
    %p215 = pneg %p214
    // Predicated region
    $region37: #{conv_with_norms.1} parent=5 // pred_check
      _
    $region38: #{conv_with_norms.1} parent=5 // pred_check_branch
      %217 = sbr.rel (%p214) target = $region40
    $region39: #{conv_with_norms.1} parent=5 // pred_region
      %s218 = ssub.s32 %s11, 1
      %s219 = ssub.s32 1, %s20
      %s220 = smul.u32 %s21, %s219
      %s221 = sadd.s32 %s220, %s20
      %p222 = scmp.lt.s32.totalorder %s221, 1
      %s223 = scalar_select %p222, %s221, 1
      %s224 = smul.addr %s223, 4
      %s225 = smul.addr %s224, 2
      %s226 = scalar_lea.vmem %s0, %s225
      %p227 = pneg %p55
      %p228 = pneg %p52
      %p229 = pneg %p76
      %p230 = pneg %p73
      %p231 = pneg %p97
      %p232 = pneg %p94
      %p233 = pneg %p118
      %p234 = pneg %p115
      %p235 = pneg %p139
      %p236 = pneg %p136
      %p237 = pneg %p167
      %p238 = pneg %p164
      %s239 = smul.u32 %s21, %s20
      %p240 = scmp.lt.s32.totalorder %s239, 1
      %s241 = scalar_select %p240, %s239, 1
      %s242 = smul.addr %s241, 3
      %s243 = smul.addr %s242, 8
      %s244 = scalar_lea.vmem %s5, %s243
      %s245 = ssub.s32 1, %s20
      %s246 = smul.u32 %s21, %s245
      %s247 = sadd.s32 %s246, %s20
      %p248 = scmp.lt.s32.totalorder %s247, 1
      %s249 = scalar_select %p248, %s247, 1
      %s250 = smul.addr %s249, 4
      %s251 = smul.addr %s250, 2
      %s252 = scalar_lea.vmem %s0, %s251
      %s253 = ssub.s32 1, %s20
      %s254 = smul.u32 %s21, %s253
      %s255 = sadd.s32 %s254, %s20
      %s256 = smul.u32 %s21, %s20
      %p257 = scmp.lt.s32.totalorder %s256, 1
      %s258 = scalar_select %p257, %s256, 1
      %s259 = smul.addr %s258, 3
      %s260 = smul.addr %s259, 8
      %s261 = scalar_lea.vmem %s5, %s260
      %s262 = smul.u32 %s21, %s20
      %p264 = scmp.eq.s32.totalorder %s20, 0
      // Predicated region
      $region41: #{conv_with_norms.1} parent=39 // pred_check
        %p265 = pneg %p264
      $region42: #{conv_with_norms.1} parent=39 // pred_check_branch
        %267 = sbr.rel (%p265) target = $region44
      $region43: #{conv_with_norms.1} parent=39 // pred_region
        %v268 = vld [vmem:[%s252] sm:$0x3]
        %v269 = vld [vmem:[%s1] sm:$0xf]
        %v270 = vld [vmem:[%s252] sm:$0xf]
        %s271 = scalar_lea.vmem %s1, 4
        %v272 = vld [vmem:[%s271] sm:$0xf]
        %v275 = vunpack.c.l.s4 1983009808
        %v276 = vunpack.c.0.s8 %v275
        %v277 = vlaneseq
        %v278 = vshrl.u32 %v277, 7
        %v279 = vsub.s32 %v276, %v278
        %v280 = vrot.slane %v270, %v279
        %v281 = vcombine.high %v280, %v280
        %282 = vrot.lane.b32.xlu0 %v280, 127
        %v283 = vpop.permute.xlu0 %282
        %284 = vrot.lane.b32.xlu0 %v281, 127
        %v285 = vpop.permute.xlu0 %284
        %vm286 = vcmask 1039360
        %v287 = vsel %vm286, %v283, %v285
        %vm288 = vcmask 31744
        %v290 = vsel %vm288, %v272, 0
        %vm292 = vcmask 1041408
        %v294 = vsel %vm292, %v287, 0
        %296 = vmatprep.subr.bf16.mxu0 0
        %297 = vmatpush1.bf16.msra.mxu0 0
        %298 = vmatprep.subr.bf16.mxu0 0
        %299 = vmatpush1.bf16.msra.mxu0 0
        %300 = vmatprep.subr.bf16.mxu0 0
        %301 = vmatpush1.bf16.msra.mxu0 0
        %302 = vmatprep.subr.bf16.mxu0 0
        %303 = vmatpush1.bf16.msra.mxu0 0
        %304 = vmatprep.subr.bf16.mxu0 0
        %305 = vmatpush1.bf16.msra.mxu0 0
        %306 = vmatprep.subr.bf16.mxu0 0
        %307 = vmatpush1.bf16.msra.mxu0 0
        %308 = vmatprep.subr.bf16.mxu0 0
        %309 = vmatpush1.bf16.msra.mxu0 0
        %310 = vmatprep.subr.bf16.mxu0 0
        %311 = vmatpush1.bf16.msra.mxu0 %v294
        %312 = vmatprep.subr.bf16.mxu0 0
        %313 = vmatpush2.bf16.msra.mxu0 0
        %314 = vmatprep.subr.bf16.mxu0 0
        %315 = vmatpush2.bf16.msra.mxu0 0
        %316 = vmatprep.subr.bf16.mxu0 0
        %317 = vmatpush2.bf16.msra.mxu0 0
        %318 = vmatprep.subr.bf16.mxu0 0
        %319 = vmatpush2.bf16.msra.mxu0 0
        %320 = vmatprep.subr.bf16.mxu0 0
        %321 = vmatpush2.bf16.msra.mxu0 0
        %322 = vmatprep.subr.bf16.mxu0 0
        %323 = vmatpush2.bf16.msra.mxu0 0
        %324 = vmatprep.subr.bf16.mxu0 0
        %325 = vmatpush2.bf16.msra.mxu0 0
        %326 = vmatprep.subr.bf16.mxu0 0
        %327 = vmatpush2.bf16.msra.mxu0 0
        %328 = vmatprep.mubr.bf16.mxu0 0
        %329 = vmatmul.mubr.bf16.gmra.mxu0 %v290
        %v330 = vpop.f32.mrf.mxu0
        %v331 = vadd.f32 0.0, %v330
        %v332 = vpop.f32.mrf.mxu0
        %v333 = vpop.f32.mrf.mxu0
        %v334 = vpop.f32.mrf.mxu0
        %335 = vdwg.mxu0
        %v337 = vsel %vm288, %v269, 0
        %v340 = vsel %vm292, %v268, 0
        %342 = vmatprep.subr.bf16.mxu0 0
        %343 = vmatpush1.bf16.msra.mxu0 0
        %344 = vmatprep.subr.bf16.mxu0 0
        %345 = vmatpush1.bf16.msra.mxu0 0
        %346 = vmatprep.subr.bf16.mxu0 0
        %347 = vmatpush1.bf16.msra.mxu0 0
        %348 = vmatprep.subr.bf16.mxu0 0
        %349 = vmatpush1.bf16.msra.mxu0 0
        %350 = vmatprep.subr.bf16.mxu0 0
        %351 = vmatpush1.bf16.msra.mxu0 0
        %352 = vmatprep.subr.bf16.mxu0 0
        %353 = vmatpush1.bf16.msra.mxu0 0
        %354 = vmatprep.subr.bf16.mxu0 0
        %355 = vmatpush1.bf16.msra.mxu0 0
        %356 = vmatprep.subr.bf16.mxu0 0
        %357 = vmatpush1.bf16.msra.mxu0 %v340
        %358 = vmatprep.subr.bf16.mxu0 0
        %359 = vmatpush2.bf16.msra.mxu0 0
        %360 = vmatprep.subr.bf16.mxu0 0
        %361 = vmatpush2.bf16.msra.mxu0 0
        %362 = vmatprep.subr.bf16.mxu0 0
        %363 = vmatpush2.bf16.msra.mxu0 0
        %364 = vmatprep.subr.bf16.mxu0 0
        %365 = vmatpush2.bf16.msra.mxu0 0
        %366 = vmatprep.subr.bf16.mxu0 0
        %367 = vmatpush2.bf16.msra.mxu0 0
        %368 = vmatprep.subr.bf16.mxu0 0
        %369 = vmatpush2.bf16.msra.mxu0 0
        %370 = vmatprep.subr.bf16.mxu0 0
        %371 = vmatpush2.bf16.msra.mxu0 0
        %372 = vmatprep.subr.bf16.mxu0 0
        %373 = vmatpush2.bf16.msra.mxu0 0
        %374 = vmatprep.mubr.bf16.mxu0 0
        %375 = vmatmul.mubr.bf16.gmra.mxu0 %v337
        %v376 = vpop.f32.mrf.mxu0
        %v377 = vadd.f32 %v331, %v376
        %v378 = vpop.f32.mrf.mxu0
        %v379 = vpop.f32.mrf.mxu0
        %v380 = vpop.f32.mrf.mxu0
        %381 = vdwg.mxu0
        %v382 = vld [vmem:[%s252] sm:$0xf]
        %s383 = scalar_lea.vmem %s1, 8
        %v384 = vld [vmem:[%s383] sm:$0xf]
        %v387 = vunpack.c.l.s4 1983009808
        %v388 = vunpack.c.0.s8 %v387
        %v389 = vlaneseq
        %v390 = vshrl.u32 %v389, 7
        %v391 = vsub.s32 %v388, %v390
        %v392 = vrot.slane %v382, %v391
        %v393 = vcombine.high %v392, %v392
        %394 = vrot.lane.b32.xlu0 %v392, 126
        %v395 = vpop.permute.xlu0 %394
        %396 = vrot.lane.b32.xlu0 %v393, 126
        %v397 = vpop.permute.xlu0 %396
        %vm398 = vcmask 1031168
        %v399 = vsel %vm398, %v395, %v397
        %v401 = vsel %vm288, %v384, 0
        %v404 = vsel %vm292, %v399, 0
        %406 = vmatprep.subr.bf16.mxu0 0
        %407 = vmatpush1.bf16.msra.mxu0 0
        %408 = vmatprep.subr.bf16.mxu0 0
        %409 = vmatpush1.bf16.msra.mxu0 0
        %410 = vmatprep.subr.bf16.mxu0 0
        %411 = vmatpush1.bf16.msra.mxu0 0
        %412 = vmatprep.subr.bf16.mxu0 0
        %413 = vmatpush1.bf16.msra.mxu0 0
        %414 = vmatprep.subr.bf16.mxu0 0
        %415 = vmatpush1.bf16.msra.mxu0 0
        %416 = vmatprep.subr.bf16.mxu0 0
        %417 = vmatpush1.bf16.msra.mxu0 0
        %418 = vmatprep.subr.bf16.mxu0 0
        %419 = vmatpush1.bf16.msra.mxu0 0
        %420 = vmatprep.subr.bf16.mxu0 0
        %421 = vmatpush1.bf16.msra.mxu0 %v404
        %422 = vmatprep.subr.bf16.mxu0 0
        %423 = vmatpush2.bf16.msra.mxu0 0
        %424 = vmatprep.subr.bf16.mxu0 0
        %425 = vmatpush2.bf16.msra.mxu0 0
        %426 = vmatprep.subr.bf16.mxu0 0
        %427 = vmatpush2.bf16.msra.mxu0 0
        %428 = vmatprep.subr.bf16.mxu0 0
        %429 = vmatpush2.bf16.msra.mxu0 0
        %430 = vmatprep.subr.bf16.mxu0 0
        %431 = vmatpush2.bf16.msra.mxu0 0
        %432 = vmatprep.subr.bf16.mxu0 0
        %433 = vmatpush2.bf16.msra.mxu0 0
        %434 = vmatprep.subr.bf16.mxu0 0
        %435 = vmatpush2.bf16.msra.mxu0 0
        %436 = vmatprep.subr.bf16.mxu0 0
        %437 = vmatpush2.bf16.msra.mxu0 0
        %438 = vmatprep.mubr.bf16.mxu0 0
        %439 = vmatmul.mubr.bf16.gmra.mxu0 %v401
        %v440 = vpop.f32.mrf.mxu0
        %v441 = vadd.f32 0.0, %v440
        %v442 = vpop.f32.mrf.mxu0
        %v443 = vpop.f32.mrf.mxu0
        %v444 = vpop.f32.mrf.mxu0
        %445 = vdwg.mxu0
        %v446 = vadd.f32 %v377, %v441
        %v447 = vld [vmem:[%s252] sm:$0xf]
        %s448 = scalar_lea.vmem %s1, 12
        %v449 = vld [vmem:[%s448] sm:$0xf]
        %v452 = vunpack.c.l.s4 1983009808
        %v453 = vunpack.c.0.s8 %v452
        %v454 = vlaneseq
        %v455 = vshrl.u32 %v454, 7
        %v456 = vsub.s32 %v453, %v455
        %v457 = vrot.slane %v447, %v456
        %v458 = vcombine.high %v457, %v457
        %459 = vrot.lane.b32.xlu0 %v457, 110
        %v460 = vpop.permute.xlu0 %459
        %461 = vrot.lane.b32.xlu0 %v458, 110
        %v462 = vpop.permute.xlu0 %461
        %vm463 = vcmask 900096
        %v464 = vsel %vm463, %v460, %v462
        %v466 = vsel %vm288, %v449, 0
        %v469 = vsel %vm292, %v464, 0
        %471 = vmatprep.subr.bf16.mxu0 0
        %472 = vmatpush1.bf16.msra.mxu0 0
        %473 = vmatprep.subr.bf16.mxu0 0
        %474 = vmatpush1.bf16.msra.mxu0 0
        %475 = vmatprep.subr.bf16.mxu0 0
        %476 = vmatpush1.bf16.msra.mxu0 0
        %477 = vmatprep.subr.bf16.mxu0 0
        %478 = vmatpush1.bf16.msra.mxu0 0
        %479 = vmatprep.subr.bf16.mxu0 0
        %480 = vmatpush1.bf16.msra.mxu0 0
        %481 = vmatprep.subr.bf16.mxu0 0
        %482 = vmatpush1.bf16.msra.mxu0 0
        %483 = vmatprep.subr.bf16.mxu0 0
        %484 = vmatpush1.bf16.msra.mxu0 0
        %485 = vmatprep.subr.bf16.mxu0 0
        %486 = vmatpush1.bf16.msra.mxu0 %v469
        %487 = vmatprep.subr.bf16.mxu0 0
        %488 = vmatpush2.bf16.msra.mxu0 0
        %489 = vmatprep.subr.bf16.mxu0 0
        %490 = vmatpush2.bf16.msra.mxu0 0
        %491 = vmatprep.subr.bf16.mxu0 0
        %492 = vmatpush2.bf16.msra.mxu0 0
        %493 = vmatprep.subr.bf16.mxu0 0
        %494 = vmatpush2.bf16.msra.mxu0 0
        %495 = vmatprep.subr.bf16.mxu0 0
        %496 = vmatpush2.bf16.msra.mxu0 0
        %497 = vmatprep.subr.bf16.mxu0 0
        %498 = vmatpush2.bf16.msra.mxu0 0
        %499 = vmatprep.subr.bf16.mxu0 0
        %500 = vmatpush2.bf16.msra.mxu0 0
        %501 = vmatprep.subr.bf16.mxu0 0
        %502 = vmatpush2.bf16.msra.mxu0 0
        %503 = vmatprep.mubr.bf16.mxu0 0
        %504 = vmatmul.mubr.bf16.gmra.mxu0 %v466
        %v505 = vpop.f32.mrf.mxu0
        %v506 = vadd.f32 0.0, %v505
        %v507 = vpop.f32.mrf.mxu0
        %v508 = vpop.f32.mrf.mxu0
        %v509 = vpop.f32.mrf.mxu0
        %510 = vdwg.mxu0
        %v511 = vadd.f32 %v446, %v506
        %v512 = vld [vmem:[%s252] sm:$0xf]
        %s513 = scalar_lea.vmem %s1, 16
        %v514 = vld [vmem:[%s513] sm:$0xf]
        %v517 = vunpack.c.l.s4 1983009808
        %v518 = vunpack.c.0.s8 %v517
        %v519 = vlaneseq
        %v520 = vshrl.u32 %v519, 7
        %v521 = vsub.s32 %v518, %v520
        %v522 = vrot.slane %v512, %v521
        %v523 = vcombine.high %v522, %v522
        %524 = vrot.lane.b32.xlu0 %v522, 109
        %v525 = vpop.permute.xlu0 %524
        %526 = vrot.lane.b32.xlu0 %v523, 109
        %v527 = vpop.permute.xlu0 %526
        %vm528 = vcmask 891904
        %v529 = vsel %vm528, %v525, %v527
        %v531 = vsel %vm288, %v514, 0
        %v534 = vsel %vm292, %v529, 0
        %536 = vmatprep.subr.bf16.mxu0 0
        %537 = vmatpush1.bf16.msra.mxu0 0
        %538 = vmatprep.subr.bf16.mxu0 0
        %539 = vmatpush1.bf16.msra.mxu0 0
        %540 = vmatprep.subr.bf16.mxu0 0
        %541 = vmatpush1.bf16.msra.mxu0 0
        %542 = vmatprep.subr.bf16.mxu0 0
        %543 = vmatpush1.bf16.msra.mxu0 0
        %544 = vmatprep.subr.bf16.mxu0 0
        %545 = vmatpush1.bf16.msra.mxu0 0
        %546 = vmatprep.subr.bf16.mxu0 0
        %547 = vmatpush1.bf16.msra.mxu0 0
        %548 = vmatprep.subr.bf16.mxu0 0
        %549 = vmatpush1.bf16.msra.mxu0 0
        %550 = vmatprep.subr.bf16.mxu0 0
        %551 = vmatpush1.bf16.msra.mxu0 %v534
        %552 = vmatprep.subr.bf16.mxu0 0
        %553 = vmatpush2.bf16.msra.mxu0 0
        %554 = vmatprep.subr.bf16.mxu0 0
        %555 = vmatpush2.bf16.msra.mxu0 0
        %556 = vmatprep.subr.bf16.mxu0 0
        %557 = vmatpush2.bf16.msra.mxu0 0
        %558 = vmatprep.subr.bf16.mxu0 0
        %559 = vmatpush2.bf16.msra.mxu0 0
        %560 = vmatprep.subr.bf16.mxu0 0
        %561 = vmatpush2.bf16.msra.mxu0 0
        %562 = vmatprep.subr.bf16.mxu0 0
        %563 = vmatpush2.bf16.msra.mxu0 0
        %564 = vmatprep.subr.bf16.mxu0 0
        %565 = vmatpush2.bf16.msra.mxu0 0
        %566 = vmatprep.subr.bf16.mxu0 0
        %567 = vmatpush2.bf16.msra.mxu0 0
        %568 = vmatprep.mubr.bf16.mxu0 0
        %569 = vmatmul.mubr.bf16.gmra.mxu0 %v531
        %v570 = vpop.f32.mrf.mxu0
        %v571 = vadd.f32 0.0, %v570
        %v572 = vpop.f32.mrf.mxu0
        %v573 = vpop.f32.mrf.mxu0
        %v574 = vpop.f32.mrf.mxu0
        %575 = vdwg.mxu0
        %v576 = vadd.f32 %v511, %v571
        %v577 = vld [vmem:[%s252] sm:$0xf]
        %s578 = scalar_lea.vmem %s1, 20
        %v579 = vld [vmem:[%s578] sm:$0xf]
        %v582 = vunpack.c.l.s4 1983009808
        %v583 = vunpack.c.0.s8 %v582
        %v584 = vlaneseq
        %v585 = vshrl.u32 %v584, 7
        %v586 = vsub.s32 %v583, %v585
        %v587 = vrot.slane %v577, %v586
        %v588 = vcombine.high %v587, %v587
        %589 = vrot.lane.b32.xlu0 %v587, 108
        %v590 = vpop.permute.xlu0 %589
        %591 = vrot.lane.b32.xlu0 %v588, 108
        %v592 = vpop.permute.xlu0 %591
        %vm593 = vcmask 883712
        %v594 = vsel %vm593, %v590, %v592
        %v596 = vsel %vm288, %v579, 0
        %v599 = vsel %vm292, %v594, 0
        %601 = vmatprep.subr.bf16.mxu0 0
        %602 = vmatpush1.bf16.msra.mxu0 0
        %603 = vmatprep.subr.bf16.mxu0 0
        %604 = vmatpush1.bf16.msra.mxu0 0
        %605 = vmatprep.subr.bf16.mxu0 0
        %606 = vmatpush1.bf16.msra.mxu0 0
        %607 = vmatprep.subr.bf16.mxu0 0
        %608 = vmatpush1.bf16.msra.mxu0 0
        %609 = vmatprep.subr.bf16.mxu0 0
        %610 = vmatpush1.bf16.msra.mxu0 0
        %611 = vmatprep.subr.bf16.mxu0 0
        %612 = vmatpush1.bf16.msra.mxu0 0
        %613 = vmatprep.subr.bf16.mxu0 0
        %614 = vmatpush1.bf16.msra.mxu0 0
        %615 = vmatprep.subr.bf16.mxu0 0
        %616 = vmatpush1.bf16.msra.mxu0 %v599
        %617 = vmatprep.subr.bf16.mxu0 0
        %618 = vmatpush2.bf16.msra.mxu0 0
        %619 = vmatprep.subr.bf16.mxu0 0
        %620 = vmatpush2.bf16.msra.mxu0 0
        %621 = vmatprep.subr.bf16.mxu0 0
        %622 = vmatpush2.bf16.msra.mxu0 0
        %623 = vmatprep.subr.bf16.mxu0 0
        %624 = vmatpush2.bf16.msra.mxu0 0
        %625 = vmatprep.subr.bf16.mxu0 0
        %626 = vmatpush2.bf16.msra.mxu0 0
        %627 = vmatprep.subr.bf16.mxu0 0
        %628 = vmatpush2.bf16.msra.mxu0 0
        %629 = vmatprep.subr.bf16.mxu0 0
        %630 = vmatpush2.bf16.msra.mxu0 0
        %631 = vmatprep.subr.bf16.mxu0 0
        %632 = vmatpush2.bf16.msra.mxu0 0
        %633 = vmatprep.mubr.bf16.mxu0 0
        %634 = vmatmul.mubr.bf16.gmra.mxu0 %v596
        %v635 = vpop.f32.mrf.mxu0
        %v636 = vadd.f32 0.0, %v635
        %v637 = vpop.f32.mrf.mxu0
        %v638 = vpop.f32.mrf.mxu0
        %v639 = vpop.f32.mrf.mxu0
        %640 = vdwg.mxu0
        %v641 = vadd.f32 %v576, %v636
        %v642 = vld [vmem:[%s252] sm:$0xf]
        %s643 = scalar_lea.vmem %s1, 24
        %v644 = vld [vmem:[%s643] sm:$0xf]
        %v647 = vunpack.c.l.s4 1983009808
        %v648 = vunpack.c.0.s8 %v647
        %v649 = vlaneseq
        %v650 = vshrl.u32 %v649, 7
        %v651 = vsub.s32 %v648, %v650
        %v652 = vrot.slane %v642, %v651
        %v653 = vcombine.high %v652, %v652
        %654 = vrot.lane.b32.xlu0 %v652, 92
        %v655 = vpop.permute.xlu0 %654
        %656 = vrot.lane.b32.xlu0 %v653, 92
        %v657 = vpop.permute.xlu0 %656
        %vm658 = vcmask 752640
        %v659 = vsel %vm658, %v655, %v657
        %v661 = vsel %vm288, %v644, 0
        %v664 = vsel %vm292, %v659, 0
        %666 = vmatprep.subr.bf16.mxu0 0
        %667 = vmatpush1.bf16.msra.mxu0 0
        %668 = vmatprep.subr.bf16.mxu0 0
        %669 = vmatpush1.bf16.msra.mxu0 0
        %670 = vmatprep.subr.bf16.mxu0 0
        %671 = vmatpush1.bf16.msra.mxu0 0
        %672 = vmatprep.subr.bf16.mxu0 0
        %673 = vmatpush1.bf16.msra.mxu0 0
        %674 = vmatprep.subr.bf16.mxu0 0
        %675 = vmatpush1.bf16.msra.mxu0 0
        %676 = vmatprep.subr.bf16.mxu0 0
        %677 = vmatpush1.bf16.msra.mxu0 0
        %678 = vmatprep.subr.bf16.mxu0 0
        %679 = vmatpush1.bf16.msra.mxu0 0
        %680 = vmatprep.subr.bf16.mxu0 0
        %681 = vmatpush1.bf16.msra.mxu0 %v664
        %682 = vmatprep.subr.bf16.mxu0 0
        %683 = vmatpush2.bf16.msra.mxu0 0
        %684 = vmatprep.subr.bf16.mxu0 0
        %685 = vmatpush2.bf16.msra.mxu0 0
        %686 = vmatprep.subr.bf16.mxu0 0
        %687 = vmatpush2.bf16.msra.mxu0 0
        %688 = vmatprep.subr.bf16.mxu0 0
        %689 = vmatpush2.bf16.msra.mxu0 0
        %690 = vmatprep.subr.bf16.mxu0 0
        %691 = vmatpush2.bf16.msra.mxu0 0
        %692 = vmatprep.subr.bf16.mxu0 0
        %693 = vmatpush2.bf16.msra.mxu0 0
        %694 = vmatprep.subr.bf16.mxu0 0
        %695 = vmatpush2.bf16.msra.mxu0 0
        %696 = vmatprep.subr.bf16.mxu0 0
        %697 = vmatpush2.bf16.msra.mxu0 0
        %698 = vmatprep.mubr.bf16.mxu0 0
        %699 = vmatmul.mubr.bf16.gmra.mxu0 %v661
        %v700 = vpop.f32.mrf.mxu0
        %v701 = vadd.f32 0.0, %v700
        %v702 = vpop.f32.mrf.mxu0
        %v703 = vpop.f32.mrf.mxu0
        %v704 = vpop.f32.mrf.mxu0
        %705 = vdwg.mxu0
        %v706 = vadd.f32 %v641, %v701
        %v707 = vld [vmem:[%s252] sm:$0xf]
        %s708 = scalar_lea.vmem %s1, 28
        %v709 = vld [vmem:[%s708] sm:$0xf]
        %v712 = vunpack.c.l.s4 1983009808
        %v713 = vunpack.c.0.s8 %v712
        %v714 = vlaneseq
        %v715 = vshrl.u32 %v714, 7
        %v716 = vsub.s32 %v713, %v715
        %v717 = vrot.slane %v707, %v716
        %v718 = vcombine.high %v717, %v717
        %719 = vrot.lane.b32.xlu0 %v717, 91
        %v720 = vpop.permute.xlu0 %719
        %721 = vrot.lane.b32.xlu0 %v718, 91
        %v722 = vpop.permute.xlu0 %721
        %vm723 = vcmask 744448
        %v724 = vsel %vm723, %v720, %v722
        %v726 = vsel %vm288, %v709, 0
        %v729 = vsel %vm292, %v724, 0
        %731 = vmatprep.subr.bf16.mxu0 0
        %732 = vmatpush1.bf16.msra.mxu0 0
        %733 = vmatprep.subr.bf16.mxu0 0
        %734 = vmatpush1.bf16.msra.mxu0 0
        %735 = vmatprep.subr.bf16.mxu0 0
        %736 = vmatpush1.bf16.msra.mxu0 0
        %737 = vmatprep.subr.bf16.mxu0 0
        %738 = vmatpush1.bf16.msra.mxu0 0
        %739 = vmatprep.subr.bf16.mxu0 0
        %740 = vmatpush1.bf16.msra.mxu0 0
        %741 = vmatprep.subr.bf16.mxu0 0
        %742 = vmatpush1.bf16.msra.mxu0 0
        %743 = vmatprep.subr.bf16.mxu0 0
        %744 = vmatpush1.bf16.msra.mxu0 0
        %745 = vmatprep.subr.bf16.mxu0 0
        %746 = vmatpush1.bf16.msra.mxu0 %v729
        %747 = vmatprep.subr.bf16.mxu0 0
        %748 = vmatpush2.bf16.msra.mxu0 0
        %749 = vmatprep.subr.bf16.mxu0 0
        %750 = vmatpush2.bf16.msra.mxu0 0
        %751 = vmatprep.subr.bf16.mxu0 0
        %752 = vmatpush2.bf16.msra.mxu0 0
        %753 = vmatprep.subr.bf16.mxu0 0
        %754 = vmatpush2.bf16.msra.mxu0 0
        %755 = vmatprep.subr.bf16.mxu0 0
        %756 = vmatpush2.bf16.msra.mxu0 0
        %757 = vmatprep.subr.bf16.mxu0 0
        %758 = vmatpush2.bf16.msra.mxu0 0
        %759 = vmatprep.subr.bf16.mxu0 0
        %760 = vmatpush2.bf16.msra.mxu0 0
        %761 = vmatprep.subr.bf16.mxu0 0
        %762 = vmatpush2.bf16.msra.mxu0 0
        %763 = vmatprep.mubr.bf16.mxu0 0
        %764 = vmatmul.mubr.bf16.gmra.mxu0 %v726
        %v765 = vpop.f32.mrf.mxu0
        %v766 = vadd.f32 0.0, %v765
        %v767 = vpop.f32.mrf.mxu0
        %v768 = vpop.f32.mrf.mxu0
        %v769 = vpop.f32.mrf.mxu0
        %770 = vdwg.mxu0
        %v771 = vadd.f32 %v706, %v766
        %v772 = vld [vmem:[%s252] sm:$0xf]
        %s773 = scalar_lea.vmem %s1, 32
        %v774 = vld [vmem:[%s773] sm:$0xf]
        %v777 = vunpack.c.l.s4 1983009808
        %v778 = vunpack.c.0.s8 %v777
        %v779 = vlaneseq
        %v780 = vshrl.u32 %v779, 7
        %v781 = vsub.s32 %v778, %v780
        %v782 = vrot.slane %v772, %v781
        %v783 = vcombine.high %v782, %v782
        %784 = vrot.lane.b32.xlu0 %v782, 90
        %v785 = vpop.permute.xlu0 %784
        %786 = vrot.lane.b32.xlu0 %v783, 90
        %v787 = vpop.permute.xlu0 %786
        %vm788 = vcmask 736256
        %v789 = vsel %vm788, %v785, %v787
        %v791 = vsel %vm288, %v774, 0
        %v794 = vsel %vm292, %v789, 0
        %796 = vmatprep.subr.bf16.mxu0 0
        %797 = vmatpush1.bf16.msra.mxu0 0
        %798 = vmatprep.subr.bf16.mxu0 0
        %799 = vmatpush1.bf16.msra.mxu0 0
        %800 = vmatprep.subr.bf16.mxu0 0
        %801 = vmatpush1.bf16.msra.mxu0 0
        %802 = vmatprep.subr.bf16.mxu0 0
        %803 = vmatpush1.bf16.msra.mxu0 0
        %804 = vmatprep.subr.bf16.mxu0 0
        %805 = vmatpush1.bf16.msra.mxu0 0
        %806 = vmatprep.subr.bf16.mxu0 0
        %807 = vmatpush1.bf16.msra.mxu0 0
        %808 = vmatprep.subr.bf16.mxu0 0
        %809 = vmatpush1.bf16.msra.mxu0 0
        %810 = vmatprep.subr.bf16.mxu0 0
        %811 = vmatpush1.bf16.msra.mxu0 %v794
        %812 = vmatprep.subr.bf16.mxu0 0
        %813 = vmatpush2.bf16.msra.mxu0 0
        %814 = vmatprep.subr.bf16.mxu0 0
        %815 = vmatpush2.bf16.msra.mxu0 0
        %816 = vmatprep.subr.bf16.mxu0 0
        %817 = vmatpush2.bf16.msra.mxu0 0
        %818 = vmatprep.subr.bf16.mxu0 0
        %819 = vmatpush2.bf16.msra.mxu0 0
        %820 = vmatprep.subr.bf16.mxu0 0
        %821 = vmatpush2.bf16.msra.mxu0 0
        %822 = vmatprep.subr.bf16.mxu0 0
        %823 = vmatpush2.bf16.msra.mxu0 0
        %824 = vmatprep.subr.bf16.mxu0 0
        %825 = vmatpush2.bf16.msra.mxu0 0
        %826 = vmatprep.subr.bf16.mxu0 0
        %827 = vmatpush2.bf16.msra.mxu0 0
        %828 = vmatprep.mubr.bf16.mxu0 0
        %829 = vmatmul.mubr.bf16.gmra.mxu0 %v791
        %v830 = vpop.f32.mrf.mxu0
        %v831 = vadd.f32 0.0, %v830
        %v832 = vpop.f32.mrf.mxu0
        %v833 = vpop.f32.mrf.mxu0
        %v834 = vpop.f32.mrf.mxu0
        %835 = vdwg.mxu0
        %v836 = vadd.f32 %v771, %v831
        %s837 = smul.u32 %s21, 3
        %s838 = smul.u32 %s837, 8
        %s839 = scalar_lea.vmem [#allocation6], %s838
        %840 = vst [vmem:[%s839] sm:$0xff] %v836
        %v841 = vld [vmem:[%s2] sm:$0x1]
        %v843 = vlaneseq
        %v844 = vshrl.u32 %v843, 7
        %v845 = vsub.s32 0, %v844
        %v846 = vrot.slane %v841, %v845
        %v848 = vmul.f32 %v836, %v846
        %v849 = vmul.f32 %v836, %v848
        %v850 = vadd.f32 %v848, 0.0
        %v851 = vadd.f32 %v849, 0.0
        %v852 = vld [vmem:[%s252 + $0x2] sm:$0x3]
        %v853 = vld [vmem:[%s1] sm:$0xf]
        %v854 = vld [vmem:[%s252 + $0x2] sm:$0xf]
        %v855 = vld [vmem:[%s271] sm:$0xf]
        %v858 = vunpack.c.l.s4 1983009808
        %v859 = vunpack.c.0.s8 %v858
        %v860 = vlaneseq
        %v861 = vshrl.u32 %v860, 7
        %v862 = vsub.s32 %v859, %v861
        %v863 = vrot.slane %v854, %v862
        %v864 = vcombine.high %v863, %v863
        %865 = vrot.lane.b32.xlu0 %v863, 127
        %v866 = vpop.permute.xlu0 %865
        %867 = vrot.lane.b32.xlu0 %v864, 127
        %v868 = vpop.permute.xlu0 %867
        %v869 = vsel %vm286, %v866, %v868
        %v871 = vsel %vm288, %v855, 0
        %v874 = vsel %vm292, %v869, 0
        %876 = vmatprep.subr.bf16.mxu0 0
        %877 = vmatpush1.bf16.msra.mxu0 0
        %878 = vmatprep.subr.bf16.mxu0 0
        %879 = vmatpush1.bf16.msra.mxu0 0
        %880 = vmatprep.subr.bf16.mxu0 0
        %881 = vmatpush1.bf16.msra.mxu0 0
        %882 = vmatprep.subr.bf16.mxu0 0
        %883 = vmatpush1.bf16.msra.mxu0 0
        %884 = vmatprep.subr.bf16.mxu0 0
        %885 = vmatpush1.bf16.msra.mxu0 0
        %886 = vmatprep.subr.bf16.mxu0 0
        %887 = vmatpush1.bf16.msra.mxu0 0
        %888 = vmatprep.subr.bf16.mxu0 0
        %889 = vmatpush1.bf16.msra.mxu0 0
        %890 = vmatprep.subr.bf16.mxu0 0
        %891 = vmatpush1.bf16.msra.mxu0 %v874
        %892 = vmatprep.subr.bf16.mxu0 0
        %893 = vmatpush2.bf16.msra.mxu0 0
        %894 = vmatprep.subr.bf16.mxu0 0
        %895 = vmatpush2.bf16.msra.mxu0 0
        %896 = vmatprep.subr.bf16.mxu0 0
        %897 = vmatpush2.bf16.msra.mxu0 0
        %898 = vmatprep.subr.bf16.mxu0 0
        %899 = vmatpush2.bf16.msra.mxu0 0
        %900 = vmatprep.subr.bf16.mxu0 0
        %901 = vmatpush2.bf16.msra.mxu0 0
        %902 = vmatprep.subr.bf16.mxu0 0
        %903 = vmatpush2.bf16.msra.mxu0 0
        %904 = vmatprep.subr.bf16.mxu0 0
        %905 = vmatpush2.bf16.msra.mxu0 0
        %906 = vmatprep.subr.bf16.mxu0 0
        %907 = vmatpush2.bf16.msra.mxu0 0
        %908 = vmatprep.mubr.bf16.mxu0 0
        %909 = vmatmul.mubr.bf16.gmra.mxu0 %v871
        %v910 = vpop.f32.mrf.mxu0
        %v911 = vadd.f32 0.0, %v910
        %v912 = vpop.f32.mrf.mxu0
        %v913 = vpop.f32.mrf.mxu0
        %v914 = vpop.f32.mrf.mxu0
        %915 = vdwg.mxu0
        %v917 = vsel %vm288, %v853, 0
        %v920 = vsel %vm292, %v852, 0
        %922 = vmatprep.subr.bf16.mxu0 0
        %923 = vmatpush1.bf16.msra.mxu0 0
        %924 = vmatprep.subr.bf16.mxu0 0
        %925 = vmatpush1.bf16.msra.mxu0 0
        %926 = vmatprep.subr.bf16.mxu0 0
        %927 = vmatpush1.bf16.msra.mxu0 0
        %928 = vmatprep.subr.bf16.mxu0 0
        %929 = vmatpush1.bf16.msra.mxu0 0
        %930 = vmatprep.subr.bf16.mxu0 0
        %931 = vmatpush1.bf16.msra.mxu0 0
        %932 = vmatprep.subr.bf16.mxu0 0
        %933 = vmatpush1.bf16.msra.mxu0 0
        %934 = vmatprep.subr.bf16.mxu0 0
        %935 = vmatpush1.bf16.msra.mxu0 0
        %936 = vmatprep.subr.bf16.mxu0 0
        %937 = vmatpush1.bf16.msra.mxu0 %v920
        %938 = vmatprep.subr.bf16.mxu0 0
        %939 = vmatpush2.bf16.msra.mxu0 0
        %940 = vmatprep.subr.bf16.mxu0 0
        %941 = vmatpush2.bf16.msra.mxu0 0
        %942 = vmatprep.subr.bf16.mxu0 0
        %943 = vmatpush2.bf16.msra.mxu0 0
        %944 = vmatprep.subr.bf16.mxu0 0
        %945 = vmatpush2.bf16.msra.mxu0 0
        %946 = vmatprep.subr.bf16.mxu0 0
        %947 = vmatpush2.bf16.msra.mxu0 0
        %948 = vmatprep.subr.bf16.mxu0 0
        %949 = vmatpush2.bf16.msra.mxu0 0
        %950 = vmatprep.subr.bf16.mxu0 0
        %951 = vmatpush2.bf16.msra.mxu0 0
        %952 = vmatprep.subr.bf16.mxu0 0
        %953 = vmatpush2.bf16.msra.mxu0 0
        %954 = vmatprep.mubr.bf16.mxu0 0
        %955 = vmatmul.mubr.bf16.gmra.mxu0 %v917
        %v956 = vpop.f32.mrf.mxu0
        %v957 = vadd.f32 %v911, %v956
        %v958 = vpop.f32.mrf.mxu0
        %v959 = vpop.f32.mrf.mxu0
        %v960 = vpop.f32.mrf.mxu0
        %961 = vdwg.mxu0
        %v962 = vld [vmem:[%s252 + $0x2] sm:$0xf]
        %v963 = vld [vmem:[%s383] sm:$0xf]
        %v966 = vunpack.c.l.s4 1983009808
        %v967 = vunpack.c.0.s8 %v966
        %v968 = vlaneseq
        %v969 = vshrl.u32 %v968, 7
        %v970 = vsub.s32 %v967, %v969
        %v971 = vrot.slane %v962, %v970
        %v972 = vcombine.high %v971, %v971
        %973 = vrot.lane.b32.xlu0 %v971, 126
        %v974 = vpop.permute.xlu0 %973
        %975 = vrot.lane.b32.xlu0 %v972, 126
        %v976 = vpop.permute.xlu0 %975
        %v977 = vsel %vm398, %v974, %v976
        %v979 = vsel %vm288, %v963, 0
        %v982 = vsel %vm292, %v977, 0
        %984 = vmatprep.subr.bf16.mxu0 0
        %985 = vmatpush1.bf16.msra.mxu0 0
        %986 = vmatprep.subr.bf16.mxu0 0
        %987 = vmatpush1.bf16.msra.mxu0 0
        %988 = vmatprep.subr.bf16.mxu0 0
        %989 = vmatpush1.bf16.msra.mxu0 0
        %990 = vmatprep.subr.bf16.mxu0 0
        %991 = vmatpush1.bf16.msra.mxu0 0
        %992 = vmatprep.subr.bf16.mxu0 0
        %993 = vmatpush1.bf16.msra.mxu0 0
        %994 = vmatprep.subr.bf16.mxu0 0
        %995 = vmatpush1.bf16.msra.mxu0 0
        %996 = vmatprep.subr.bf16.mxu0 0
        %997 = vmatpush1.bf16.msra.mxu0 0
        %998 = vmatprep.subr.bf16.mxu0 0
        %999 = vmatpush1.bf16.msra.mxu0 %v982
        %1000 = vmatprep.subr.bf16.mxu0 0
        %1001 = vmatpush2.bf16.msra.mxu0 0
        %1002 = vmatprep.subr.bf16.mxu0 0
        %1003 = vmatpush2.bf16.msra.mxu0 0
        %1004 = vmatprep.subr.bf16.mxu0 0
        %1005 = vmatpush2.bf16.msra.mxu0 0
        %1006 = vmatprep.subr.bf16.mxu0 0
        %1007 = vmatpush2.bf16.msra.mxu0 0
        %1008 = vmatprep.subr.bf16.mxu0 0
        %1009 = vmatpush2.bf16.msra.mxu0 0
        %1010 = vmatprep.subr.bf16.mxu0 0
        %1011 = vmatpush2.bf16.msra.mxu0 0
        %1012 = vmatprep.subr.bf16.mxu0 0
        %1013 = vmatpush2.bf16.msra.mxu0 0
        %1014 = vmatprep.subr.bf16.mxu0 0
        %1015 = vmatpush2.bf16.msra.mxu0 0
        %1016 = vmatprep.mubr.bf16.mxu0 0
        %1017 = vmatmul.mubr.bf16.gmra.mxu0 %v979
        %v1018 = vpop.f32.mrf.mxu0
        %v1019 = vadd.f32 0.0, %v1018
        %v1020 = vpop.f32.mrf.mxu0
        %v1021 = vpop.f32.mrf.mxu0
        %v1022 = vpop.f32.mrf.mxu0
        %1023 = vdwg.mxu0
        %v1024 = vadd.f32 %v957, %v1019
        %v1025 = vld [vmem:[%s252 + $0x2] sm:$0xf]
        %v1026 = vld [vmem:[%s448] sm:$0xf]
        %v1029 = vunpack.c.l.s4 1983009808
        %v1030 = vunpack.c.0.s8 %v1029
        %v1031 = vlaneseq
        %v1032 = vshrl.u32 %v1031, 7
        %v1033 = vsub.s32 %v1030, %v1032
        %v1034 = vrot.slane %v1025, %v1033
        %v1035 = vcombine.high %v1034, %v1034
        %1036 = vrot.lane.b32.xlu0 %v1034, 110
        %v1037 = vpop.permute.xlu0 %1036
        %1038 = vrot.lane.b32.xlu0 %v1035, 110
        %v1039 = vpop.permute.xlu0 %1038
        %v1040 = vsel %vm463, %v1037, %v1039
        %v1042 = vsel %vm288, %v1026, 0
        %v1045 = vsel %vm292, %v1040, 0
        %1047 = vmatprep.subr.bf16.mxu0 0
        %1048 = vmatpush1.bf16.msra.mxu0 0
        %1049 = vmatprep.subr.bf16.mxu0 0
        %1050 = vmatpush1.bf16.msra.mxu0 0
        %1051 = vmatprep.subr.bf16.mxu0 0
        %1052 = vmatpush1.bf16.msra.mxu0 0
        %1053 = vmatprep.subr.bf16.mxu0 0
        %1054 = vmatpush1.bf16.msra.mxu0 0
        %1055 = vmatprep.subr.bf16.mxu0 0
        %1056 = vmatpush1.bf16.msra.mxu0 0
        %1057 = vmatprep.subr.bf16.mxu0 0
        %1058 = vmatpush1.bf16.msra.mxu0 0
        %1059 = vmatprep.subr.bf16.mxu0 0
        %1060 = vmatpush1.bf16.msra.mxu0 0
        %1061 = vmatprep.subr.bf16.mxu0 0
        %1062 = vmatpush1.bf16.msra.mxu0 %v1045
        %1063 = vmatprep.subr.bf16.mxu0 0
        %1064 = vmatpush2.bf16.msra.mxu0 0
        %1065 = vmatprep.subr.bf16.mxu0 0
        %1066 = vmatpush2.bf16.msra.mxu0 0
        %1067 = vmatprep.subr.bf16.mxu0 0
        %1068 = vmatpush2.bf16.msra.mxu0 0
        %1069 = vmatprep.subr.bf16.mxu0 0
        %1070 = vmatpush2.bf16.msra.mxu0 0
        %1071 = vmatprep.subr.bf16.mxu0 0
        %1072 = vmatpush2.bf16.msra.mxu0 0
        %1073 = vmatprep.subr.bf16.mxu0 0
        %1074 = vmatpush2.bf16.msra.mxu0 0
        %1075 = vmatprep.subr.bf16.mxu0 0
        %1076 = vmatpush2.bf16.msra.mxu0 0
        %1077 = vmatprep.subr.bf16.mxu0 0
        %1078 = vmatpush2.bf16.msra.mxu0 0
        %1079 = vmatprep.mubr.bf16.mxu0 0
        %1080 = vmatmul.mubr.bf16.gmra.mxu0 %v1042
        %v1081 = vpop.f32.mrf.mxu0
        %v1082 = vadd.f32 0.0, %v1081
        %v1083 = vpop.f32.mrf.mxu0
        %v1084 = vpop.f32.mrf.mxu0
        %v1085 = vpop.f32.mrf.mxu0
        %1086 = vdwg.mxu0
        %v1087 = vadd.f32 %v1024, %v1082
        %v1088 = vld [vmem:[%s252 + $0x2] sm:$0xf]
        %v1089 = vld [vmem:[%s513] sm:$0xf]
        %v1092 = vunpack.c.l.s4 1983009808
        %v1093 = vunpack.c.0.s8 %v1092
        %v1094 = vlaneseq
        %v1095 = vshrl.u32 %v1094, 7
        %v1096 = vsub.s32 %v1093, %v1095
        %v1097 = vrot.slane %v1088, %v1096
        %v1098 = vcombine.high %v1097, %v1097
        %1099 = vrot.lane.b32.xlu0 %v1097, 109
        %v1100 = vpop.permute.xlu0 %1099
        %1101 = vrot.lane.b32.xlu0 %v1098, 109
        %v1102 = vpop.permute.xlu0 %1101
        %v1103 = vsel %vm528, %v1100, %v1102
        %v1105 = vsel %vm288, %v1089, 0
        %v1108 = vsel %vm292, %v1103, 0
        %1110 = vmatprep.subr.bf16.mxu0 0
        %1111 = vmatpush1.bf16.msra.mxu0 0
        %1112 = vmatprep.subr.bf16.mxu0 0
        %1113 = vmatpush1.bf16.msra.mxu0 0
        %1114 = vmatprep.subr.bf16.mxu0 0
        %1115 = vmatpush1.bf16.msra.mxu0 0
        %1116 = vmatprep.subr.bf16.mxu0 0
        %1117 = vmatpush1.bf16.msra.mxu0 0
        %1118 = vmatprep.subr.bf16.mxu0 0
        %1119 = vmatpush1.bf16.msra.mxu0 0
        %1120 = vmatprep.subr.bf16.mxu0 0
        %1121 = vmatpush1.bf16.msra.mxu0 0
        %1122 = vmatprep.subr.bf16.mxu0 0
        %1123 = vmatpush1.bf16.msra.mxu0 0
        %1124 = vmatprep.subr.bf16.mxu0 0
        %1125 = vmatpush1.bf16.msra.mxu0 %v1108
        %1126 = vmatprep.subr.bf16.mxu0 0
        %1127 = vmatpush2.bf16.msra.mxu0 0
        %1128 = vmatprep.subr.bf16.mxu0 0
        %1129 = vmatpush2.bf16.msra.mxu0 0
        %1130 = vmatprep.subr.bf16.mxu0 0
        %1131 = vmatpush2.bf16.msra.mxu0 0
        %1132 = vmatprep.subr.bf16.mxu0 0
        %1133 = vmatpush2.bf16.msra.mxu0 0
        %1134 = vmatprep.subr.bf16.mxu0 0
        %1135 = vmatpush2.bf16.msra.mxu0 0
        %1136 = vmatprep.subr.bf16.mxu0 0
        %1137 = vmatpush2.bf16.msra.mxu0 0
        %1138 = vmatprep.subr.bf16.mxu0 0
        %1139 = vmatpush2.bf16.msra.mxu0 0
        %1140 = vmatprep.subr.bf16.mxu0 0
        %1141 = vmatpush2.bf16.msra.mxu0 0
        %1142 = vmatprep.mubr.bf16.mxu0 0
        %1143 = vmatmul.mubr.bf16.gmra.mxu0 %v1105
        %v1144 = vpop.f32.mrf.mxu0
        %v1145 = vadd.f32 0.0, %v1144
        %v1146 = vpop.f32.mrf.mxu0
        %v1147 = vpop.f32.mrf.mxu0
        %v1148 = vpop.f32.mrf.mxu0
        %1149 = vdwg.mxu0
        %v1150 = vadd.f32 %v1087, %v1145
        %v1151 = vld [vmem:[%s252 + $0x2] sm:$0xf]
        %v1152 = vld [vmem:[%s578] sm:$0xf]
        %v1155 = vunpack.c.l.s4 1983009808
        %v1156 = vunpack.c.0.s8 %v1155
        %v1157 = vlaneseq
        %v1158 = vshrl.u32 %v1157, 7
        %v1159 = vsub.s32 %v1156, %v1158
        %v1160 = vrot.slane %v1151, %v1159
        %v1161 = vcombine.high %v1160, %v1160
        %1162 = vrot.lane.b32.xlu0 %v1160, 108
        %v1163 = vpop.permute.xlu0 %1162
        %1164 = vrot.lane.b32.xlu0 %v1161, 108
        %v1165 = vpop.permute.xlu0 %1164
        %v1166 = vsel %vm593, %v1163, %v1165
        %v1168 = vsel %vm288, %v1152, 0
        %v1171 = vsel %vm292, %v1166, 0
        %1173 = vmatprep.subr.bf16.mxu0 0
        %1174 = vmatpush1.bf16.msra.mxu0 0
        %1175 = vmatprep.subr.bf16.mxu0 0
        %1176 = vmatpush1.bf16.msra.mxu0 0
        %1177 = vmatprep.subr.bf16.mxu0 0
        %1178 = vmatpush1.bf16.msra.mxu0 0
        %1179 = vmatprep.subr.bf16.mxu0 0
        %1180 = vmatpush1.bf16.msra.mxu0 0
        %1181 = vmatprep.subr.bf16.mxu0 0
        %1182 = vmatpush1.bf16.msra.mxu0 0
        %1183 = vmatprep.subr.bf16.mxu0 0
        %1184 = vmatpush1.bf16.msra.mxu0 0
        %1185 = vmatprep.subr.bf16.mxu0 0
        %1186 = vmatpush1.bf16.msra.mxu0 0
        %1187 = vmatprep.subr.bf16.mxu0 0
        %1188 = vmatpush1.bf16.msra.mxu0 %v1171
        %1189 = vmatprep.subr.bf16.mxu0 0
        %1190 = vmatpush2.bf16.msra.mxu0 0
        %1191 = vmatprep.subr.bf16.mxu0 0
        %1192 = vmatpush2.bf16.msra.mxu0 0
        %1193 = vmatprep.subr.bf16.mxu0 0
        %1194 = vmatpush2.bf16.msra.mxu0 0
        %1195 = vmatprep.subr.bf16.mxu0 0
        %1196 = vmatpush2.bf16.msra.mxu0 0
        %1197 = vmatprep.subr.bf16.mxu0 0
        %1198 = vmatpush2.bf16.msra.mxu0 0
        %1199 = vmatprep.subr.bf16.mxu0 0
        %1200 = vmatpush2.bf16.msra.mxu0 0
        %1201 = vmatprep.subr.bf16.mxu0 0
        %1202 = vmatpush2.bf16.msra.mxu0 0
        %1203 = vmatprep.subr.bf16.mxu0 0
        %1204 = vmatpush2.bf16.msra.mxu0 0
        %1205 = vmatprep.mubr.bf16.mxu0 0
        %1206 = vmatmul.mubr.bf16.gmra.mxu0 %v1168
        %v1207 = vpop.f32.mrf.mxu0
        %v1208 = vadd.f32 0.0, %v1207
        %v1209 = vpop.f32.mrf.mxu0
        %v1210 = vpop.f32.mrf.mxu0
        %v1211 = vpop.f32.mrf.mxu0
        %1212 = vdwg.mxu0
        %v1213 = vadd.f32 %v1150, %v1208
        %v1214 = vld [vmem:[%s252 + $0x2] sm:$0xf]
        %v1215 = vld [vmem:[%s643] sm:$0xf]
        %v1218 = vunpack.c.l.s4 1983009808
        %v1219 = vunpack.c.0.s8 %v1218
        %v1220 = vlaneseq
        %v1221 = vshrl.u32 %v1220, 7
        %v1222 = vsub.s32 %v1219, %v1221
        %v1223 = vrot.slane %v1214, %v1222
        %v1224 = vcombine.high %v1223, %v1223
        %1225 = vrot.lane.b32.xlu0 %v1223, 92
        %v1226 = vpop.permute.xlu0 %1225
        %1227 = vrot.lane.b32.xlu0 %v1224, 92
        %v1228 = vpop.permute.xlu0 %1227
        %v1229 = vsel %vm658, %v1226, %v1228
        %v1231 = vsel %vm288, %v1215, 0
        %v1234 = vsel %vm292, %v1229, 0
        %1236 = vmatprep.subr.bf16.mxu0 0
        %1237 = vmatpush1.bf16.msra.mxu0 0
        %1238 = vmatprep.subr.bf16.mxu0 0
        %1239 = vmatpush1.bf16.msra.mxu0 0
        %1240 = vmatprep.subr.bf16.mxu0 0
        %1241 = vmatpush1.bf16.msra.mxu0 0
        %1242 = vmatprep.subr.bf16.mxu0 0
        %1243 = vmatpush1.bf16.msra.mxu0 0
        %1244 = vmatprep.subr.bf16.mxu0 0
        %1245 = vmatpush1.bf16.msra.mxu0 0
        %1246 = vmatprep.subr.bf16.mxu0 0
        %1247 = vmatpush1.bf16.msra.mxu0 0
        %1248 = vmatprep.subr.bf16.mxu0 0
        %1249 = vmatpush1.bf16.msra.mxu0 0
        %1250 = vmatprep.subr.bf16.mxu0 0
        %1251 = vmatpush1.bf16.msra.mxu0 %v1234
        %1252 = vmatprep.subr.bf16.mxu0 0
        %1253 = vmatpush2.bf16.msra.mxu0 0
        %1254 = vmatprep.subr.bf16.mxu0 0
        %1255 = vmatpush2.bf16.msra.mxu0 0
        %1256 = vmatprep.subr.bf16.mxu0 0
        %1257 = vmatpush2.bf16.msra.mxu0 0
        %1258 = vmatprep.subr.bf16.mxu0 0
        %1259 = vmatpush2.bf16.msra.mxu0 0
        %1260 = vmatprep.subr.bf16.mxu0 0
        %1261 = vmatpush2.bf16.msra.mxu0 0
        %1262 = vmatprep.subr.bf16.mxu0 0
        %1263 = vmatpush2.bf16.msra.mxu0 0
        %1264 = vmatprep.subr.bf16.mxu0 0
        %1265 = vmatpush2.bf16.msra.mxu0 0
        %1266 = vmatprep.subr.bf16.mxu0 0
        %1267 = vmatpush2.bf16.msra.mxu0 0
        %1268 = vmatprep.mubr.bf16.mxu0 0
        %1269 = vmatmul.mubr.bf16.gmra.mxu0 %v1231
        %v1270 = vpop.f32.mrf.mxu0
        %v1271 = vadd.f32 0.0, %v1270
        %v1272 = vpop.f32.mrf.mxu0
        %v1273 = vpop.f32.mrf.mxu0
        %v1274 = vpop.f32.mrf.mxu0
        %1275 = vdwg.mxu0
        %v1276 = vadd.f32 %v1213, %v1271
        %v1277 = vld [vmem:[%s252 + $0x2] sm:$0xf]
        %v1278 = vld [vmem:[%s708] sm:$0xf]
        %v1281 = vunpack.c.l.s4 1983009808
        %v1282 = vunpack.c.0.s8 %v1281
        %v1283 = vlaneseq
        %v1284 = vshrl.u32 %v1283, 7
        %v1285 = vsub.s32 %v1282, %v1284
        %v1286 = vrot.slane %v1277, %v1285
        %v1287 = vcombine.high %v1286, %v1286
        %1288 = vrot.lane.b32.xlu0 %v1286, 91
        %v1289 = vpop.permute.xlu0 %1288
        %1290 = vrot.lane.b32.xlu0 %v1287, 91
        %v1291 = vpop.permute.xlu0 %1290
        %v1292 = vsel %vm723, %v1289, %v1291
        %v1294 = vsel %vm288, %v1278, 0
        %v1297 = vsel %vm292, %v1292, 0
        %1299 = vmatprep.subr.bf16.mxu0 0
        %1300 = vmatpush1.bf16.msra.mxu0 0
        %1301 = vmatprep.subr.bf16.mxu0 0
        %1302 = vmatpush1.bf16.msra.mxu0 0
        %1303 = vmatprep.subr.bf16.mxu0 0
        %1304 = vmatpush1.bf16.msra.mxu0 0
        %1305 = vmatprep.subr.bf16.mxu0 0
        %1306 = vmatpush1.bf16.msra.mxu0 0
        %1307 = vmatprep.subr.bf16.mxu0 0
        %1308 = vmatpush1.bf16.msra.mxu0 0
        %1309 = vmatprep.subr.bf16.mxu0 0
        %1310 = vmatpush1.bf16.msra.mxu0 0
        %1311 = vmatprep.subr.bf16.mxu0 0
        %1312 = vmatpush1.bf16.msra.mxu0 0
        %1313 = vmatprep.subr.bf16.mxu0 0
        %1314 = vmatpush1.bf16.msra.mxu0 %v1297
        %1315 = vmatprep.subr.bf16.mxu0 0
        %1316 = vmatpush2.bf16.msra.mxu0 0
        %1317 = vmatprep.subr.bf16.mxu0 0
        %1318 = vmatpush2.bf16.msra.mxu0 0
        %1319 = vmatprep.subr.bf16.mxu0 0
        %1320 = vmatpush2.bf16.msra.mxu0 0
        %1321 = vmatprep.subr.bf16.mxu0 0
        %1322 = vmatpush2.bf16.msra.mxu0 0
        %1323 = vmatprep.subr.bf16.mxu0 0
        %1324 = vmatpush2.bf16.msra.mxu0 0
        %1325 = vmatprep.subr.bf16.mxu0 0
        %1326 = vmatpush2.bf16.msra.mxu0 0
        %1327 = vmatprep.subr.bf16.mxu0 0
        %1328 = vmatpush2.bf16.msra.mxu0 0
        %1329 = vmatprep.subr.bf16.mxu0 0
        %1330 = vmatpush2.bf16.msra.mxu0 0
        %1331 = vmatprep.mubr.bf16.mxu0 0
        %1332 = vmatmul.mubr.bf16.gmra.mxu0 %v1294
        %v1333 = vpop.f32.mrf.mxu0
        %v1334 = vadd.f32 0.0, %v1333
        %v1335 = vpop.f32.mrf.mxu0
        %v1336 = vpop.f32.mrf.mxu0
        %v1337 = vpop.f32.mrf.mxu0
        %1338 = vdwg.mxu0
        %v1339 = vadd.f32 %v1276, %v1334
        %v1340 = vld [vmem:[%s252 + $0x2] sm:$0xf]
        %v1341 = vld [vmem:[%s773] sm:$0xf]
        %v1344 = vunpack.c.l.s4 1983009808
        %v1345 = vunpack.c.0.s8 %v1344
        %v1346 = vlaneseq
        %v1347 = vshrl.u32 %v1346, 7
        %v1348 = vsub.s32 %v1345, %v1347
        %v1349 = vrot.slane %v1340, %v1348
        %v1350 = vcombine.high %v1349, %v1349
        %1351 = vrot.lane.b32.xlu0 %v1349, 90
        %v1352 = vpop.permute.xlu0 %1351
        %1353 = vrot.lane.b32.xlu0 %v1350, 90
        %v1354 = vpop.permute.xlu0 %1353
        %v1355 = vsel %vm788, %v1352, %v1354
        %v1357 = vsel %vm288, %v1341, 0
        %v1360 = vsel %vm292, %v1355, 0
        %1362 = vmatprep.subr.bf16.mxu0 0
        %1363 = vmatpush1.bf16.msra.mxu0 0
        %1364 = vmatprep.subr.bf16.mxu0 0
        %1365 = vmatpush1.bf16.msra.mxu0 0
        %1366 = vmatprep.subr.bf16.mxu0 0
        %1367 = vmatpush1.bf16.msra.mxu0 0
        %1368 = vmatprep.subr.bf16.mxu0 0
        %1369 = vmatpush1.bf16.msra.mxu0 0
        %1370 = vmatprep.subr.bf16.mxu0 0
        %1371 = vmatpush1.bf16.msra.mxu0 0
        %1372 = vmatprep.subr.bf16.mxu0 0
        %1373 = vmatpush1.bf16.msra.mxu0 0
        %1374 = vmatprep.subr.bf16.mxu0 0
        %1375 = vmatpush1.bf16.msra.mxu0 0
        %1376 = vmatprep.subr.bf16.mxu0 0
        %1377 = vmatpush1.bf16.msra.mxu0 %v1360
        %1378 = vmatprep.subr.bf16.mxu0 0
        %1379 = vmatpush2.bf16.msra.mxu0 0
        %1380 = vmatprep.subr.bf16.mxu0 0
        %1381 = vmatpush2.bf16.msra.mxu0 0
        %1382 = vmatprep.subr.bf16.mxu0 0
        %1383 = vmatpush2.bf16.msra.mxu0 0
        %1384 = vmatprep.subr.bf16.mxu0 0
        %1385 = vmatpush2.bf16.msra.mxu0 0
        %1386 = vmatprep.subr.bf16.mxu0 0
        %1387 = vmatpush2.bf16.msra.mxu0 0
        %1388 = vmatprep.subr.bf16.mxu0 0
        %1389 = vmatpush2.bf16.msra.mxu0 0
        %1390 = vmatprep.subr.bf16.mxu0 0
        %1391 = vmatpush2.bf16.msra.mxu0 0
        %1392 = vmatprep.subr.bf16.mxu0 0
        %1393 = vmatpush2.bf16.msra.mxu0 0
        %1394 = vmatprep.mubr.bf16.mxu0 0
        %1395 = vmatmul.mubr.bf16.gmra.mxu0 %v1357
        %v1396 = vpop.f32.mrf.mxu0
        %v1397 = vadd.f32 0.0, %v1396
        %v1398 = vpop.f32.mrf.mxu0
        %v1399 = vpop.f32.mrf.mxu0
        %v1400 = vpop.f32.mrf.mxu0
        %1401 = vdwg.mxu0
        %v1402 = vadd.f32 %v1339, %v1397
        %s1403 = sadd.s32 %s837, 1
        %s1404 = smul.u32 %s1403, 8
        %s1405 = scalar_lea.vmem [#allocation6], %s1404
        %1406 = vst [vmem:[%s1405] sm:$0xff] %v1402
        %v1407 = vld [vmem:[%s2 + $0x1] sm:$0x1]
        %v1409 = vlaneseq
        %v1410 = vshrl.u32 %v1409, 7
        %v1411 = vsub.s32 0, %v1410
        %v1412 = vrot.slane %v1407, %v1411
        %v1414 = vmul.f32 %v1402, %v1412
        %v1415 = vmul.f32 %v1402, %v1414
        %v1416 = vadd.f32 %v850, %v1414
        %v1417 = vadd.f32 %v851, %v1415
        %v1418 = vld [vmem:[%s252 + $0x4] sm:$0x3]
        %v1419 = vld [vmem:[%s1] sm:$0xf]
        %v1420 = vld [vmem:[%s252 + $0x4] sm:$0xf]
        %v1421 = vld [vmem:[%s271] sm:$0xf]
        %v1424 = vunpack.c.l.s4 1983009808
        %v1425 = vunpack.c.0.s8 %v1424
        %v1426 = vlaneseq
        %v1427 = vshrl.u32 %v1426, 7
        %v1428 = vsub.s32 %v1425, %v1427
        %v1429 = vrot.slane %v1420, %v1428
        %v1430 = vcombine.high %v1429, %v1429
        %1431 = vrot.lane.b32.xlu0 %v1429, 127
        %v1432 = vpop.permute.xlu0 %1431
        %1433 = vrot.lane.b32.xlu0 %v1430, 127
        %v1434 = vpop.permute.xlu0 %1433
        %v1435 = vsel %vm286, %v1432, %v1434
        %v1437 = vsel %vm288, %v1421, 0
        %v1440 = vsel %vm292, %v1435, 0
        %1442 = vmatprep.subr.bf16.mxu0 0
        %1443 = vmatpush1.bf16.msra.mxu0 0
        %1444 = vmatprep.subr.bf16.mxu0 0
        %1445 = vmatpush1.bf16.msra.mxu0 0
        %1446 = vmatprep.subr.bf16.mxu0 0
        %1447 = vmatpush1.bf16.msra.mxu0 0
        %1448 = vmatprep.subr.bf16.mxu0 0
        %1449 = vmatpush1.bf16.msra.mxu0 0
        %1450 = vmatprep.subr.bf16.mxu0 0
        %1451 = vmatpush1.bf16.msra.mxu0 0
        %1452 = vmatprep.subr.bf16.mxu0 0
        %1453 = vmatpush1.bf16.msra.mxu0 0
        %1454 = vmatprep.subr.bf16.mxu0 0
        %1455 = vmatpush1.bf16.msra.mxu0 0
        %1456 = vmatprep.subr.bf16.mxu0 0
        %1457 = vmatpush1.bf16.msra.mxu0 %v1440
        %1458 = vmatprep.subr.bf16.mxu0 0
        %1459 = vmatpush2.bf16.msra.mxu0 0
        %1460 = vmatprep.subr.bf16.mxu0 0
        %1461 = vmatpush2.bf16.msra.mxu0 0
        %1462 = vmatprep.subr.bf16.mxu0 0
        %1463 = vmatpush2.bf16.msra.mxu0 0
        %1464 = vmatprep.subr.bf16.mxu0 0
        %1465 = vmatpush2.bf16.msra.mxu0 0
        %1466 = vmatprep.subr.bf16.mxu0 0
        %1467 = vmatpush2.bf16.msra.mxu0 0
        %1468 = vmatprep.subr.bf16.mxu0 0
        %1469 = vmatpush2.bf16.msra.mxu0 0
        %1470 = vmatprep.subr.bf16.mxu0 0
        %1471 = vmatpush2.bf16.msra.mxu0 0
        %1472 = vmatprep.subr.bf16.mxu0 0
        %1473 = vmatpush2.bf16.msra.mxu0 0
        %1474 = vmatprep.mubr.bf16.mxu0 0
        %1475 = vmatmul.mubr.bf16.gmra.mxu0 %v1437
        %v1476 = vpop.f32.mrf.mxu0
        %v1477 = vadd.f32 0.0, %v1476
        %v1478 = vpop.f32.mrf.mxu0
        %v1479 = vpop.f32.mrf.mxu0
        %v1480 = vpop.f32.mrf.mxu0
        %1481 = vdwg.mxu0
        %v1483 = vsel %vm288, %v1419, 0
        %v1486 = vsel %vm292, %v1418, 0
        %1488 = vmatprep.subr.bf16.mxu0 0
        %1489 = vmatpush1.bf16.msra.mxu0 0
        %1490 = vmatprep.subr.bf16.mxu0 0
        %1491 = vmatpush1.bf16.msra.mxu0 0
        %1492 = vmatprep.subr.bf16.mxu0 0
        %1493 = vmatpush1.bf16.msra.mxu0 0
        %1494 = vmatprep.subr.bf16.mxu0 0
        %1495 = vmatpush1.bf16.msra.mxu0 0
        %1496 = vmatprep.subr.bf16.mxu0 0
        %1497 = vmatpush1.bf16.msra.mxu0 0
        %1498 = vmatprep.subr.bf16.mxu0 0
        %1499 = vmatpush1.bf16.msra.mxu0 0
        %1500 = vmatprep.subr.bf16.mxu0 0
        %1501 = vmatpush1.bf16.msra.mxu0 0
        %1502 = vmatprep.subr.bf16.mxu0 0
        %1503 = vmatpush1.bf16.msra.mxu0 %v1486
        %1504 = vmatprep.subr.bf16.mxu0 0
        %1505 = vmatpush2.bf16.msra.mxu0 0
        %1506 = vmatprep.subr.bf16.mxu0 0
        %1507 = vmatpush2.bf16.msra.mxu0 0
        %1508 = vmatprep.subr.bf16.mxu0 0
        %1509 = vmatpush2.bf16.msra.mxu0 0
        %1510 = vmatprep.subr.bf16.mxu0 0
        %1511 = vmatpush2.bf16.msra.mxu0 0
        %1512 = vmatprep.subr.bf16.mxu0 0
        %1513 = vmatpush2.bf16.msra.mxu0 0
        %1514 = vmatprep.subr.bf16.mxu0 0
        %1515 = vmatpush2.bf16.msra.mxu0 0
        %1516 = vmatprep.subr.bf16.mxu0 0
        %1517 = vmatpush2.bf16.msra.mxu0 0
        %1518 = vmatprep.subr.bf16.mxu0 0
        %1519 = vmatpush2.bf16.msra.mxu0 0
        %1520 = vmatprep.mubr.bf16.mxu0 0
        %1521 = vmatmul.mubr.bf16.gmra.mxu0 %v1483
        %v1522 = vpop.f32.mrf.mxu0
        %v1523 = vadd.f32 %v1477, %v1522
        %v1524 = vpop.f32.mrf.mxu0
        %v1525 = vpop.f32.mrf.mxu0
        %v1526 = vpop.f32.mrf.mxu0
        %1527 = vdwg.mxu0
        %v1528 = vld [vmem:[%s252 + $0x4] sm:$0xf]
        %v1529 = vld [vmem:[%s383] sm:$0xf]
        %v1532 = vunpack.c.l.s4 1983009808
        %v1533 = vunpack.c.0.s8 %v1532
        %v1534 = vlaneseq
        %v1535 = vshrl.u32 %v1534, 7
        %v1536 = vsub.s32 %v1533, %v1535
        %v1537 = vrot.slane %v1528, %v1536
        %v1538 = vcombine.high %v1537, %v1537
        %1539 = vrot.lane.b32.xlu0 %v1537, 126
        %v1540 = vpop.permute.xlu0 %1539
        %1541 = vrot.lane.b32.xlu0 %v1538, 126
        %v1542 = vpop.permute.xlu0 %1541
        %v1543 = vsel %vm398, %v1540, %v1542
        %v1545 = vsel %vm288, %v1529, 0
        %v1548 = vsel %vm292, %v1543, 0
        %1550 = vmatprep.subr.bf16.mxu0 0
        %1551 = vmatpush1.bf16.msra.mxu0 0
        %1552 = vmatprep.subr.bf16.mxu0 0
        %1553 = vmatpush1.bf16.msra.mxu0 0
        %1554 = vmatprep.subr.bf16.mxu0 0
        %1555 = vmatpush1.bf16.msra.mxu0 0
        %1556 = vmatprep.subr.bf16.mxu0 0
        %1557 = vmatpush1.bf16.msra.mxu0 0
        %1558 = vmatprep.subr.bf16.mxu0 0
        %1559 = vmatpush1.bf16.msra.mxu0 0
        %1560 = vmatprep.subr.bf16.mxu0 0
        %1561 = vmatpush1.bf16.msra.mxu0 0
        %1562 = vmatprep.subr.bf16.mxu0 0
        %1563 = vmatpush1.bf16.msra.mxu0 0
        %1564 = vmatprep.subr.bf16.mxu0 0
        %1565 = vmatpush1.bf16.msra.mxu0 %v1548
        %1566 = vmatprep.subr.bf16.mxu0 0
        %1567 = vmatpush2.bf16.msra.mxu0 0
        %1568 = vmatprep.subr.bf16.mxu0 0
        %1569 = vmatpush2.bf16.msra.mxu0 0
        %1570 = vmatprep.subr.bf16.mxu0 0
        %1571 = vmatpush2.bf16.msra.mxu0 0
        %1572 = vmatprep.subr.bf16.mxu0 0
        %1573 = vmatpush2.bf16.msra.mxu0 0
        %1574 = vmatprep.subr.bf16.mxu0 0
        %1575 = vmatpush2.bf16.msra.mxu0 0
        %1576 = vmatprep.subr.bf16.mxu0 0
        %1577 = vmatpush2.bf16.msra.mxu0 0
        %1578 = vmatprep.subr.bf16.mxu0 0
        %1579 = vmatpush2.bf16.msra.mxu0 0
        %1580 = vmatprep.subr.bf16.mxu0 0
        %1581 = vmatpush2.bf16.msra.mxu0 0
        %1582 = vmatprep.mubr.bf16.mxu0 0
        %1583 = vmatmul.mubr.bf16.gmra.mxu0 %v1545
        %v1584 = vpop.f32.mrf.mxu0
        %v1585 = vadd.f32 0.0, %v1584
        %v1586 = vpop.f32.mrf.mxu0
        %v1587 = vpop.f32.mrf.mxu0
        %v1588 = vpop.f32.mrf.mxu0
        %1589 = vdwg.mxu0
        %v1590 = vadd.f32 %v1523, %v1585
        %v1591 = vld [vmem:[%s252 + $0x4] sm:$0xf]
        %v1592 = vld [vmem:[%s448] sm:$0xf]
        %v1595 = vunpack.c.l.s4 1983009808
        %v1596 = vunpack.c.0.s8 %v1595
        %v1597 = vlaneseq
        %v1598 = vshrl.u32 %v1597, 7
        %v1599 = vsub.s32 %v1596, %v1598
        %v1600 = vrot.slane %v1591, %v1599
        %v1601 = vcombine.high %v1600, %v1600
        %1602 = vrot.lane.b32.xlu0 %v1600, 110
        %v1603 = vpop.permute.xlu0 %1602
        %1604 = vrot.lane.b32.xlu0 %v1601, 110
        %v1605 = vpop.permute.xlu0 %1604
        %v1606 = vsel %vm463, %v1603, %v1605
        %v1608 = vsel %vm288, %v1592, 0
        %v1611 = vsel %vm292, %v1606, 0
        %1613 = vmatprep.subr.bf16.mxu0 0
        %1614 = vmatpush1.bf16.msra.mxu0 0
        %1615 = vmatprep.subr.bf16.mxu0 0
        %1616 = vmatpush1.bf16.msra.mxu0 0
        %1617 = vmatprep.subr.bf16.mxu0 0
        %1618 = vmatpush1.bf16.msra.mxu0 0
        %1619 = vmatprep.subr.bf16.mxu0 0
        %1620 = vmatpush1.bf16.msra.mxu0 0
        %1621 = vmatprep.subr.bf16.mxu0 0
        %1622 = vmatpush1.bf16.msra.mxu0 0
        %1623 = vmatprep.subr.bf16.mxu0 0
        %1624 = vmatpush1.bf16.msra.mxu0 0
        %1625 = vmatprep.subr.bf16.mxu0 0
        %1626 = vmatpush1.bf16.msra.mxu0 0
        %1627 = vmatprep.subr.bf16.mxu0 0
        %1628 = vmatpush1.bf16.msra.mxu0 %v1611
        %1629 = vmatprep.subr.bf16.mxu0 0
        %1630 = vmatpush2.bf16.msra.mxu0 0
        %1631 = vmatprep.subr.bf16.mxu0 0
        %1632 = vmatpush2.bf16.msra.mxu0 0
        %1633 = vmatprep.subr.bf16.mxu0 0
        %1634 = vmatpush2.bf16.msra.mxu0 0
        %1635 = vmatprep.subr.bf16.mxu0 0
        %1636 = vmatpush2.bf16.msra.mxu0 0
        %1637 = vmatprep.subr.bf16.mxu0 0
        %1638 = vmatpush2.bf16.msra.mxu0 0
        %1639 = vmatprep.subr.bf16.mxu0 0
        %1640 = vmatpush2.bf16.msra.mxu0 0
        %1641 = vmatprep.subr.bf16.mxu0 0
        %1642 = vmatpush2.bf16.msra.mxu0 0
        %1643 = vmatprep.subr.bf16.mxu0 0
        %1644 = vmatpush2.bf16.msra.mxu0 0
        %1645 = vmatprep.mubr.bf16.mxu0 0
        %1646 = vmatmul.mubr.bf16.gmra.mxu0 %v1608
        %v1647 = vpop.f32.mrf.mxu0
        %v1648 = vadd.f32 0.0, %v1647
        %v1649 = vpop.f32.mrf.mxu0
        %v1650 = vpop.f32.mrf.mxu0
        %v1651 = vpop.f32.mrf.mxu0
        %1652 = vdwg.mxu0
        %v1653 = vadd.f32 %v1590, %v1648
        %v1654 = vld [vmem:[%s252 + $0x4] sm:$0xf]
        %v1655 = vld [vmem:[%s513] sm:$0xf]
        %v1658 = vunpack.c.l.s4 1983009808
        %v1659 = vunpack.c.0.s8 %v1658
        %v1660 = vlaneseq
        %v1661 = vshrl.u32 %v1660, 7
        %v1662 = vsub.s32 %v1659, %v1661
        %v1663 = vrot.slane %v1654, %v1662
        %v1664 = vcombine.high %v1663, %v1663
        %1665 = vrot.lane.b32.xlu0 %v1663, 109
        %v1666 = vpop.permute.xlu0 %1665
        %1667 = vrot.lane.b32.xlu0 %v1664, 109
        %v1668 = vpop.permute.xlu0 %1667
        %v1669 = vsel %vm528, %v1666, %v1668
        %v1671 = vsel %vm288, %v1655, 0
        %v1674 = vsel %vm292, %v1669, 0
        %1676 = vmatprep.subr.bf16.mxu0 0
        %1677 = vmatpush1.bf16.msra.mxu0 0
        %1678 = vmatprep.subr.bf16.mxu0 0
        %1679 = vmatpush1.bf16.msra.mxu0 0
        %1680 = vmatprep.subr.bf16.mxu0 0
        %1681 = vmatpush1.bf16.msra.mxu0 0
        %1682 = vmatprep.subr.bf16.mxu0 0
        %1683 = vmatpush1.bf16.msra.mxu0 0
        %1684 = vmatprep.subr.bf16.mxu0 0
        %1685 = vmatpush1.bf16.msra.mxu0 0
        %1686 = vmatprep.subr.bf16.mxu0 0
        %1687 = vmatpush1.bf16.msra.mxu0 0
        %1688 = vmatprep.subr.bf16.mxu0 0
        %1689 = vmatpush1.bf16.msra.mxu0 0
        %1690 = vmatprep.subr.bf16.mxu0 0
        %1691 = vmatpush1.bf16.msra.mxu0 %v1674
        %1692 = vmatprep.subr.bf16.mxu0 0
        %1693 = vmatpush2.bf16.msra.mxu0 0
        %1694 = vmatprep.subr.bf16.mxu0 0
        %1695 = vmatpush2.bf16.msra.mxu0 0
        %1696 = vmatprep.subr.bf16.mxu0 0
        %1697 = vmatpush2.bf16.msra.mxu0 0
        %1698 = vmatprep.subr.bf16.mxu0 0
        %1699 = vmatpush2.bf16.msra.mxu0 0
        %1700 = vmatprep.subr.bf16.mxu0 0
        %1701 = vmatpush2.bf16.msra.mxu0 0
        %1702 = vmatprep.subr.bf16.mxu0 0
        %1703 = vmatpush2.bf16.msra.mxu0 0
        %1704 = vmatprep.subr.bf16.mxu0 0
        %1705 = vmatpush2.bf16.msra.mxu0 0
        %1706 = vmatprep.subr.bf16.mxu0 0
        %1707 = vmatpush2.bf16.msra.mxu0 0
        %1708 = vmatprep.mubr.bf16.mxu0 0
        %1709 = vmatmul.mubr.bf16.gmra.mxu0 %v1671
        %v1710 = vpop.f32.mrf.mxu0
        %v1711 = vadd.f32 0.0, %v1710
        %v1712 = vpop.f32.mrf.mxu0
        %v1713 = vpop.f32.mrf.mxu0
        %v1714 = vpop.f32.mrf.mxu0
        %1715 = vdwg.mxu0
        %v1716 = vadd.f32 %v1653, %v1711
        %v1717 = vld [vmem:[%s252 + $0x4] sm:$0xf]
        %v1718 = vld [vmem:[%s578] sm:$0xf]
        %v1721 = vunpack.c.l.s4 1983009808
        %v1722 = vunpack.c.0.s8 %v1721
        %v1723 = vlaneseq
        %v1724 = vshrl.u32 %v1723, 7
        %v1725 = vsub.s32 %v1722, %v1724
        %v1726 = vrot.slane %v1717, %v1725
        %v1727 = vcombine.high %v1726, %v1726
        %1728 = vrot.lane.b32.xlu0 %v1726, 108
        %v1729 = vpop.permute.xlu0 %1728
        %1730 = vrot.lane.b32.xlu0 %v1727, 108
        %v1731 = vpop.permute.xlu0 %1730
        %v1732 = vsel %vm593, %v1729, %v1731
        %v1734 = vsel %vm288, %v1718, 0
        %v1737 = vsel %vm292, %v1732, 0
        %1739 = vmatprep.subr.bf16.mxu0 0
        %1740 = vmatpush1.bf16.msra.mxu0 0
        %1741 = vmatprep.subr.bf16.mxu0 0
        %1742 = vmatpush1.bf16.msra.mxu0 0
        %1743 = vmatprep.subr.bf16.mxu0 0
        %1744 = vmatpush1.bf16.msra.mxu0 0
        %1745 = vmatprep.subr.bf16.mxu0 0
        %1746 = vmatpush1.bf16.msra.mxu0 0
        %1747 = vmatprep.subr.bf16.mxu0 0
        %1748 = vmatpush1.bf16.msra.mxu0 0
        %1749 = vmatprep.subr.bf16.mxu0 0
        %1750 = vmatpush1.bf16.msra.mxu0 0
        %1751 = vmatprep.subr.bf16.mxu0 0
        %1752 = vmatpush1.bf16.msra.mxu0 0
        %1753 = vmatprep.subr.bf16.mxu0 0
        %1754 = vmatpush1.bf16.msra.mxu0 %v1737
        %1755 = vmatprep.subr.bf16.mxu0 0
        %1756 = vmatpush2.bf16.msra.mxu0 0
        %1757 = vmatprep.subr.bf16.mxu0 0
        %1758 = vmatpush2.bf16.msra.mxu0 0
        %1759 = vmatprep.subr.bf16.mxu0 0
        %1760 = vmatpush2.bf16.msra.mxu0 0
        %1761 = vmatprep.subr.bf16.mxu0 0
        %1762 = vmatpush2.bf16.msra.mxu0 0
        %1763 = vmatprep.subr.bf16.mxu0 0
        %1764 = vmatpush2.bf16.msra.mxu0 0
        %1765 = vmatprep.subr.bf16.mxu0 0
        %1766 = vmatpush2.bf16.msra.mxu0 0
        %1767 = vmatprep.subr.bf16.mxu0 0
        %1768 = vmatpush2.bf16.msra.mxu0 0
        %1769 = vmatprep.subr.bf16.mxu0 0
        %1770 = vmatpush2.bf16.msra.mxu0 0
        %1771 = vmatprep.mubr.bf16.mxu0 0
        %1772 = vmatmul.mubr.bf16.gmra.mxu0 %v1734
        %v1773 = vpop.f32.mrf.mxu0
        %v1774 = vadd.f32 0.0, %v1773
        %v1775 = vpop.f32.mrf.mxu0
        %v1776 = vpop.f32.mrf.mxu0
        %v1777 = vpop.f32.mrf.mxu0
        %1778 = vdwg.mxu0
        %v1779 = vadd.f32 %v1716, %v1774
        %v1780 = vld [vmem:[%s252 + $0x4] sm:$0xf]
        %v1781 = vld [vmem:[%s643] sm:$0xf]
        %v1784 = vunpack.c.l.s4 1983009808
        %v1785 = vunpack.c.0.s8 %v1784
        %v1786 = vlaneseq
        %v1787 = vshrl.u32 %v1786, 7
        %v1788 = vsub.s32 %v1785, %v1787
        %v1789 = vrot.slane %v1780, %v1788
        %v1790 = vcombine.high %v1789, %v1789
        %1791 = vrot.lane.b32.xlu0 %v1789, 92
        %v1792 = vpop.permute.xlu0 %1791
        %1793 = vrot.lane.b32.xlu0 %v1790, 92
        %v1794 = vpop.permute.xlu0 %1793
        %v1795 = vsel %vm658, %v1792, %v1794
        %v1797 = vsel %vm288, %v1781, 0
        %v1800 = vsel %vm292, %v1795, 0
        %1802 = vmatprep.subr.bf16.mxu0 0
        %1803 = vmatpush1.bf16.msra.mxu0 0
        %1804 = vmatprep.subr.bf16.mxu0 0
        %1805 = vmatpush1.bf16.msra.mxu0 0
        %1806 = vmatprep.subr.bf16.mxu0 0
        %1807 = vmatpush1.bf16.msra.mxu0 0
        %1808 = vmatprep.subr.bf16.mxu0 0
        %1809 = vmatpush1.bf16.msra.mxu0 0
        %1810 = vmatprep.subr.bf16.mxu0 0
        %1811 = vmatpush1.bf16.msra.mxu0 0
        %1812 = vmatprep.subr.bf16.mxu0 0
        %1813 = vmatpush1.bf16.msra.mxu0 0
        %1814 = vmatprep.subr.bf16.mxu0 0
        %1815 = vmatpush1.bf16.msra.mxu0 0
        %1816 = vmatprep.subr.bf16.mxu0 0
        %1817 = vmatpush1.bf16.msra.mxu0 %v1800
        %1818 = vmatprep.subr.bf16.mxu0 0
        %1819 = vmatpush2.bf16.msra.mxu0 0
        %1820 = vmatprep.subr.bf16.mxu0 0
        %1821 = vmatpush2.bf16.msra.mxu0 0
        %1822 = vmatprep.subr.bf16.mxu0 0
        %1823 = vmatpush2.bf16.msra.mxu0 0
        %1824 = vmatprep.subr.bf16.mxu0 0
        %1825 = vmatpush2.bf16.msra.mxu0 0
        %1826 = vmatprep.subr.bf16.mxu0 0
        %1827 = vmatpush2.bf16.msra.mxu0 0
        %1828 = vmatprep.subr.bf16.mxu0 0
        %1829 = vmatpush2.bf16.msra.mxu0 0
        %1830 = vmatprep.subr.bf16.mxu0 0
        %1831 = vmatpush2.bf16.msra.mxu0 0
        %1832 = vmatprep.subr.bf16.mxu0 0
        %1833 = vmatpush2.bf16.msra.mxu0 0
        %1834 = vmatprep.mubr.bf16.mxu0 0
        %1835 = vmatmul.mubr.bf16.gmra.mxu0 %v1797
        %v1836 = vpop.f32.mrf.mxu0
        %v1837 = vadd.f32 0.0, %v1836
        %v1838 = vpop.f32.mrf.mxu0
        %v1839 = vpop.f32.mrf.mxu0
        %v1840 = vpop.f32.mrf.mxu0
        %1841 = vdwg.mxu0
        %v1842 = vadd.f32 %v1779, %v1837
        %v1843 = vld [vmem:[%s252 + $0x4] sm:$0xf]
        %v1844 = vld [vmem:[%s708] sm:$0xf]
        %v1847 = vunpack.c.l.s4 1983009808
        %v1848 = vunpack.c.0.s8 %v1847
        %v1849 = vlaneseq
        %v1850 = vshrl.u32 %v1849, 7
        %v1851 = vsub.s32 %v1848, %v1850
        %v1852 = vrot.slane %v1843, %v1851
        %v1853 = vcombine.high %v1852, %v1852
        %1854 = vrot.lane.b32.xlu0 %v1852, 91
        %v1855 = vpop.permute.xlu0 %1854
        %1856 = vrot.lane.b32.xlu0 %v1853, 91
        %v1857 = vpop.permute.xlu0 %1856
        %v1858 = vsel %vm723, %v1855, %v1857
        %v1860 = vsel %vm288, %v1844, 0
        %v1863 = vsel %vm292, %v1858, 0
        %1865 = vmatprep.subr.bf16.mxu0 0
        %1866 = vmatpush1.bf16.msra.mxu0 0
        %1867 = vmatprep.subr.bf16.mxu0 0
        %1868 = vmatpush1.bf16.msra.mxu0 0
        %1869 = vmatprep.subr.bf16.mxu0 0
        %1870 = vmatpush1.bf16.msra.mxu0 0
        %1871 = vmatprep.subr.bf16.mxu0 0
        %1872 = vmatpush1.bf16.msra.mxu0 0
        %1873 = vmatprep.subr.bf16.mxu0 0
        %1874 = vmatpush1.bf16.msra.mxu0 0
        %1875 = vmatprep.subr.bf16.mxu0 0
        %1876 = vmatpush1.bf16.msra.mxu0 0
        %1877 = vmatprep.subr.bf16.mxu0 0
        %1878 = vmatpush1.bf16.msra.mxu0 0
        %1879 = vmatprep.subr.bf16.mxu0 0
        %1880 = vmatpush1.bf16.msra.mxu0 %v1863
        %1881 = vmatprep.subr.bf16.mxu0 0
        %1882 = vmatpush2.bf16.msra.mxu0 0
        %1883 = vmatprep.subr.bf16.mxu0 0
        %1884 = vmatpush2.bf16.msra.mxu0 0
        %1885 = vmatprep.subr.bf16.mxu0 0
        %1886 = vmatpush2.bf16.msra.mxu0 0
        %1887 = vmatprep.subr.bf16.mxu0 0
        %1888 = vmatpush2.bf16.msra.mxu0 0
        %1889 = vmatprep.subr.bf16.mxu0 0
        %1890 = vmatpush2.bf16.msra.mxu0 0
        %1891 = vmatprep.subr.bf16.mxu0 0
        %1892 = vmatpush2.bf16.msra.mxu0 0
        %1893 = vmatprep.subr.bf16.mxu0 0
        %1894 = vmatpush2.bf16.msra.mxu0 0
        %1895 = vmatprep.subr.bf16.mxu0 0
        %1896 = vmatpush2.bf16.msra.mxu0 0
        %1897 = vmatprep.mubr.bf16.mxu0 0
        %1898 = vmatmul.mubr.bf16.gmra.mxu0 %v1860
        %v1899 = vpop.f32.mrf.mxu0
        %v1900 = vadd.f32 0.0, %v1899
        %v1901 = vpop.f32.mrf.mxu0
        %v1902 = vpop.f32.mrf.mxu0
        %v1903 = vpop.f32.mrf.mxu0
        %1904 = vdwg.mxu0
        %v1905 = vadd.f32 %v1842, %v1900
        %v1906 = vld [vmem:[%s252 + $0x4] sm:$0xf]
        %v1907 = vld [vmem:[%s773] sm:$0xf]
        %v1910 = vunpack.c.l.s4 1983009808
        %v1911 = vunpack.c.0.s8 %v1910
        %v1912 = vlaneseq
        %v1913 = vshrl.u32 %v1912, 7
        %v1914 = vsub.s32 %v1911, %v1913
        %v1915 = vrot.slane %v1906, %v1914
        %v1916 = vcombine.high %v1915, %v1915
        %1917 = vrot.lane.b32.xlu0 %v1915, 90
        %v1918 = vpop.permute.xlu0 %1917
        %1919 = vrot.lane.b32.xlu0 %v1916, 90
        %v1920 = vpop.permute.xlu0 %1919
        %v1921 = vsel %vm788, %v1918, %v1920
        %v1923 = vsel %vm288, %v1907, 0
        %v1926 = vsel %vm292, %v1921, 0
        %1928 = vmatprep.subr.bf16.mxu0 0
        %1929 = vmatpush1.bf16.msra.mxu0 0
        %1930 = vmatprep.subr.bf16.mxu0 0
        %1931 = vmatpush1.bf16.msra.mxu0 0
        %1932 = vmatprep.subr.bf16.mxu0 0
        %1933 = vmatpush1.bf16.msra.mxu0 0
        %1934 = vmatprep.subr.bf16.mxu0 0
        %1935 = vmatpush1.bf16.msra.mxu0 0
        %1936 = vmatprep.subr.bf16.mxu0 0
        %1937 = vmatpush1.bf16.msra.mxu0 0
        %1938 = vmatprep.subr.bf16.mxu0 0
        %1939 = vmatpush1.bf16.msra.mxu0 0
        %1940 = vmatprep.subr.bf16.mxu0 0
        %1941 = vmatpush1.bf16.msra.mxu0 0
        %1942 = vmatprep.subr.bf16.mxu0 0
        %1943 = vmatpush1.bf16.msra.mxu0 %v1926
        %1944 = vmatprep.subr.bf16.mxu0 0
        %1945 = vmatpush2.bf16.msra.mxu0 0
        %1946 = vmatprep.subr.bf16.mxu0 0
        %1947 = vmatpush2.bf16.msra.mxu0 0
        %1948 = vmatprep.subr.bf16.mxu0 0
        %1949 = vmatpush2.bf16.msra.mxu0 0
        %1950 = vmatprep.subr.bf16.mxu0 0
        %1951 = vmatpush2.bf16.msra.mxu0 0
        %1952 = vmatprep.subr.bf16.mxu0 0
        %1953 = vmatpush2.bf16.msra.mxu0 0
        %1954 = vmatprep.subr.bf16.mxu0 0
        %1955 = vmatpush2.bf16.msra.mxu0 0
        %1956 = vmatprep.subr.bf16.mxu0 0
        %1957 = vmatpush2.bf16.msra.mxu0 0
        %1958 = vmatprep.subr.bf16.mxu0 0
        %1959 = vmatpush2.bf16.msra.mxu0 0
        %1960 = vmatprep.mubr.bf16.mxu0 0
        %1961 = vmatmul.mubr.bf16.gmra.mxu0 %v1923
        %v1962 = vpop.f32.mrf.mxu0
        %v1963 = vadd.f32 0.0, %v1962
        %v1964 = vpop.f32.mrf.mxu0
        %v1965 = vpop.f32.mrf.mxu0
        %v1966 = vpop.f32.mrf.mxu0
        %1967 = vdwg.mxu0
        %v1968 = vadd.f32 %v1905, %v1963
        %s1969 = sadd.s32 %s837, 2
        %s1970 = smul.u32 %s1969, 8
        %s1971 = scalar_lea.vmem [#allocation6], %s1970
        %1972 = vst [vmem:[%s1971] sm:$0xff] %v1968
        %v1973 = vld [vmem:[%s2 + $0x2] sm:$0x1]
        %v1975 = vlaneseq
        %v1976 = vshrl.u32 %v1975, 7
        %v1977 = vsub.s32 0, %v1976
        %v1978 = vrot.slane %v1973, %v1977
        %v1980 = vmul.f32 %v1968, %v1978
        %v1981 = vmul.f32 %v1968, %v1980
        %v1982 = vadd.f32 %v1416, %v1980
        %v1983 = vadd.f32 %v1417, %v1981
        %p1984 = scmp.eq.s32.totalorder %s21, 0
        // Predicated region
        $region45: #{conv_with_norms.1} parent=43 // pred_check
          %p1985 = pneg %p1984
        $region46: #{conv_with_norms.1} parent=43 // pred_check_branch
          %1987 = sbr.rel (%p1985) target = $region48
        $region47: #{conv_with_norms.1} parent=43 // pred_region
          %1988 = vst [vmem:[#allocation2] sm:$0xff] %v1982
          %1989 = vst [vmem:[#allocation3] sm:$0xff] %v1983
        $region48: #{conv_with_norms.1} parent=43 // pred_fallthru
          _
        %p1990 = scmp.gt.s32.totalorder %s21, 0
        // Predicated region
        $region49: #{conv_with_norms.1} parent=43 // pred_check
          %p1991 = pneg %p1990
        $region50: #{conv_with_norms.1} parent=43 // pred_check_branch
          %1993 = sbr.rel (%p1991) target = $region52
        $region51: #{conv_with_norms.1} parent=43 // pred_region
          %v1994 = vld [vmem:[#allocation2] sm:$0xff]
          %v1995 = vadd.f32 %v1994, %v1982
          %1996 = vst [vmem:[#allocation2] sm:$0xff] %v1995
          %v1997 = vld [vmem:[#allocation3] sm:$0xff]
          %v1998 = vadd.f32 %v1997, %v1983
          %1999 = vst [vmem:[#allocation3] sm:$0xff] %v1998
        $region52: #{conv_with_norms.1} parent=43 // pred_fallthru
          _
      $region44: #{conv_with_norms.1} parent=39 // pred_fallthru
        _
      %p2000 = scmp.eq.s32.totalorder %s20, 1
      // Predicated region
      $region53: #{conv_with_norms.1} parent=39 // pred_check
        %p2001 = pneg %p2000
      $region54: #{conv_with_norms.1} parent=39 // pred_check_branch
        %2003 = sbr.rel (%p2001) target = $region56
      $region55: #{conv_with_norms.1} parent=39 // pred_region
        %p2004 = scmp.eq.s32.totalorder %s21, 0
        // Predicated region
        $region57: #{conv_with_norms.1} parent=55 // pred_check
          %p2005 = pneg %p2004
        $region58: #{conv_with_norms.1} parent=55 // pred_check_branch
          %2007 = sbr.rel (%p2005) target = $region60
        $region59: #{conv_with_norms.1} parent=55 // pred_region
          %v2008 = vld [vmem:[#allocation2] sm:$0xff]
          %2009 = vadd.xlane.f32.xlu0 %v2008
          %v2010 = vpop.xlane.xlu0 %2009
          %v2011 = vld [vmem:[#allocation3] sm:$0xff]
          %2012 = vadd.xlane.f32.xlu0 %v2011
          %v2013 = vpop.xlane.xlu0 %2012
          %v2014 = vmul.f32 %v2010, 0.001953125
          %v2015 = vmul.f32 %v2013, 0.001953125
          %v2016 = vmul.f32 %v2014, %v2014
          %v2017 = vsub.f32 %v2015, %v2016
          %v2018 = vmax.f32 %v2017, 0.0
          %v2019 = vld [vmem:[%s3] sm:$0xff]
          %v2020 = vadd.f32 %v2018, 1e-05
          %v2021 = vrsqrt.pop %v2020
          %v2022 = vmul.f32 %v2019, %v2021
          %vm2023 = vcmask 7168
          %2024 = vst.msk [vmem:[#allocation4] sm:$0xff] %vm2023, %v2022
          %v2025 = vld [vmem:[%s4] sm:$0xff]
          %v2026 = vmul.f32 %v2014, %v2022
          %v2027 = vsub.f32 %v2025, %v2026
          %2028 = vst.msk [vmem:[#allocation5] sm:$0xff] %vm2023, %v2027
        $region60: #{conv_with_norms.1} parent=55 // pred_fallthru
          _
        %v2029 = vld [vmem:[#allocation4] sm:$0xff]
        %v2030 = vld [vmem:[#allocation5] sm:$0xff]
        %s2031 = smul.u32 %s21, 3
        %s2032 = smul.u32 %s2031, 8
        %s2033 = scalar_lea.vmem [#allocation6], %s2032
        %v2034 = vld [vmem:[%s2033] sm:$0xff]
        %2036 = vset.pattern.permute.xlu0 0
        %2037 = vperm.xlu0 %2036, %v2029
        %v2038 = vpop.permute.xlu0 %2037
        %v2040 = vmul.f32 %v2034, %v2038
        %2042 = vset.pattern.permute.xlu0 0
        %2043 = vperm.xlu0 %2042, %v2030
        %v2044 = vpop.permute.xlu0 %2043
        %v2046 = vadd.f32 %v2040, %v2044
        %v2047 = vmul.f32 %v2046, 0.5
        %v2048 = vmul.f32 %v2046, 0.044715
        %v2049 = vmul.f32 %v2048, %v2046
        %v2050 = vmul.f32 %v2049, %v2046
        %v2051 = vadd.f32 %v2046, %v2050
        %v2052 = vmul.f32 %v2051, 0.7978846
        %v2053 = vtanh.pop %v2052
        %v2054 = vadd.f32 %v2053, 1.0
        %v2055 = vmul.f32 %v2047, %v2054
        %2056 = vst [vmem:[%s261] sm:$0xff] %v2055
        %s2057 = sadd.s32 %s2031, 1
        %s2058 = smul.u32 %s2057, 8
        %s2059 = scalar_lea.vmem [#allocation6], %s2058
        %v2060 = vld [vmem:[%s2059] sm:$0xff]
        %v2061 = vmul.f32 %v2060, %v2038
        %v2062 = vadd.f32 %v2061, %v2044
        %v2063 = vmul.f32 %v2062, 0.5
        %v2064 = vmul.f32 %v2062, 0.044715
        %v2065 = vmul.f32 %v2064, %v2062
        %v2066 = vmul.f32 %v2065, %v2062
        %v2067 = vadd.f32 %v2062, %v2066
        %v2068 = vmul.f32 %v2067, 0.7978846
        %v2069 = vtanh.pop %v2068
        %v2070 = vadd.f32 %v2069, 1.0
        %v2071 = vmul.f32 %v2063, %v2070
        %2072 = vst [vmem:[%s261 + $0x8] sm:$0xff] %v2071
        %s2073 = sadd.s32 %s2031, 2
        %s2074 = smul.u32 %s2073, 8
        %s2075 = scalar_lea.vmem [#allocation6], %s2074
        %v2076 = vld [vmem:[%s2075] sm:$0xff]
        %v2077 = vmul.f32 %v2076, %v2038
        %v2078 = vadd.f32 %v2077, %v2044
        %v2079 = vmul.f32 %v2078, 0.5
        %v2080 = vmul.f32 %v2078, 0.044715
        %v2081 = vmul.f32 %v2080, %v2078
        %v2082 = vmul.f32 %v2081, %v2078
        %v2083 = vadd.f32 %v2078, %v2082
        %v2084 = vmul.f32 %v2083, 0.7978846
        %v2085 = vtanh.pop %v2084
        %v2086 = vadd.f32 %v2085, 1.0
        %v2087 = vmul.f32 %v2079, %v2086
        %2088 = vst [vmem:[%s261 + $0x10] sm:$0xff] %v2087
      $region56: #{conv_with_norms.1} parent=39 // pred_fallthru
        _
      %s2089 = smul.u32 %s21, %s20
      %p2090 = scmp.lt.s32.totalorder %s2089, 1
      %s2091 = scalar_select %p2090, %s2089, 1
      %s2092 = smul.addr %s2091, 3
      %s2093 = smul.addr %s2092, 8
      %s2094 = scalar_lea.vmem %s5, %s2093
      // Predicated region
      $region61: #{conv_with_norms.1} parent=39 // pred_check
        %p2095 = pneg %p164
      $region62: #{conv_with_norms.1} parent=39 // pred_check_branch
        %2097 = sbr.rel (%p2095) target = $region64
      $region63: #{conv_with_norms.1} parent=39 // pred_region
        %s2098 = smul.u32 %s21, %s20
      $region64: #{conv_with_norms.1} parent=39 // pred_fallthru
        _
    $region40: #{conv_with_norms.1} parent=5 // pred_fallthru
      _
    %p2099 = scmp.le.s32.totalorder 2, %s11
    // Predicated region
    $region65: #{conv_with_norms.1} parent=5 // pred_check
      %p2100 = pneg %p2099
    $region66: #{conv_with_norms.1} parent=5 // pred_check_branch
      %2102 = sbr.rel (%p2100) target = $region68
    $region67: #{conv_with_norms.1} parent=5 // pred_region
      %s2103 = ssub.s32 %s11, 2
      // Predicated region
      $region69: #{conv_with_norms.1} parent=67 // pred_check
        %p2104 = pneg %p170
      $region70: #{conv_with_norms.1} parent=67 // pred_check_branch
        %2106 = sbr.rel (%p2104) target = $region72
      $region71: #{conv_with_norms.1} parent=67 // pred_region
        %s2107 = smul.u32 %s23, %s22
        %p2108 = scmp.lt.s32.totalorder %s2107, 1
        %s2109 = scalar_select %p2108, %s2107, 1
        %s2110 = smul.addr %s2109, 3
        %s2111 = smul.addr %s2110, 8
        %s2112 = scalar_lea.vmem %s5, %s2111
      $region72: #{conv_with_norms.1} parent=67 // pred_fallthru
        _
    $region68: #{conv_with_norms.1} parent=5 // pred_fallthru
      _
  $region6: #{conv_with_norms.1} parent=0 // loop_footer
    %s15 = sadd.s32 1, %s11
  $region7: #{conv_with_norms.1} parent=0 // loop_footer_branch
    %10 = sbr.rel target = $region3
  $region8: #{conv_with_norms.1} parent=0 // loop_exit
    _

</llo_original>
